<compile_context>
chip_gen: v7x
topology: tpu7x:2x2x1
jax: 0.10.0
libtpu: 0.0.40
codegen_flags: <defaults>
</compile_context>

<pallas_src>
import functools

import jax
import jax.numpy as jnp
from jax.experimental import pallas as pl
from jax.experimental.pallas import tpu as pltpu


# ----------------------------- helpers -----------------------------

def _round_up(x, m):
    return (x + m - 1) // m * m


@functools.lru_cache(maxsize=None)
def _vmem_budget_bytes():
    """Generation-aware VMEM budget: ~100 MiB on v5e/v6e (128 MiB VMEM), ~48 MiB on v7x."""
    try:
        info = pltpu.get_tpu_info()
        cap = int(getattr(info, "vmem_capacity_bytes", 64 * 1024 * 1024))
    except Exception:
        cap = 64 * 1024 * 1024
    return min(cap * 3 // 4, 100 * 1024 * 1024)


def _choose_tile(dim, cap, align):
    """Return (tile, padded_dim).  Prefer a tile that divides dim (no padding, no slicing)."""
    if dim <= cap:
        return dim, dim                  # block == full dim: always layout-legal
    cap -= cap % align
    t = cap
    while t * 2 >= cap and t >= align:   # only accept reasonably large divisors
        if dim % t == 0:
            return t, dim
        t -= align
    return cap, _round_up(dim, cap)      # fallback: pad (rare; not hit by this model)


# ----------------------------- fused matmul kernel -----------------------------
# out = [LN(x)] @ W + b  [-> QuickGELU]  [+ residual]
# Grid = (M-tiles, N-tiles), full-K blocks (CLIP K <= 4*width), both axes parallel.

def _make_fused_matmul_kernel(has_bias, has_ln, has_res, activation, eps):
    def kernel(*refs):
        it = iter(refs)
        x_ref = next(it)
        w_ref = next(it)
        b_ref = next(it) if has_bias else None
        g_ref = next(it) if has_ln else None
        bt_ref = next(it) if has_ln else None
        r_ref = next(it) if has_res else None
        o_ref = next(it)

        if has_ln:
            xf = x_ref[...].astype(jnp.float32)
            mu = jnp.mean(xf, axis=-1, keepdims=True)
            var = jnp.mean(jnp.square(xf - mu), axis=-1, keepdims=True)
            xf = (xf - mu) * jax.lax.rsqrt(var + eps)
            xf = xf * g_ref[...] + bt_ref[...]
            xmm = xf.astype(jnp.bfloat16)
        else:
            xmm = x_ref[...].astype(jnp.bfloat16)   # no-op if already bf16
        acc = jnp.dot(xmm, w_ref[...], preferred_element_type=jnp.float32)
        if has_bias:
            acc = acc + b_ref[...]
        if activation == "quickgelu":
            acc = acc * jax.nn.sigmoid(1.702 * acc)       # CLIP QuickGELU
        if has_res:
            acc = acc + r_ref[...]
        o_ref[...] = acc.astype(o_ref.dtype)

    return kernel


def fused_matmul(x, w, b=None, *, ln_g=None, ln_b=None, activation=None,
                 residual=None, out_dtype=jnp.float32, eps=1e-5):
    """x: [R, K].  w: [K, N] bf16 (pre-prepped).  b: [1, N] f32.  ln_g/ln_b: [1, K] f32.
       residual: [R, N] f32.  Returns [R, N] in out_dtype."""
    R, K = x.shape
    Kw, N = w.shape
    assert Kw == K
    has_ln = ln_g is not None
    has_bias = b is not None
    has_res = residual is not None

    budget = _vmem_budget_bytes()
    xb = x.dtype.itemsize
    tn, Np = _choose_tile(N, 512, 128)

    # Largest row tile whose double-buffered footprint fits the (generation-aware) budget.
    tm_cap = 8
    for cap in (1024, 768, 512, 384, 256, 128, 64, 32, 16, 8):
        tm_try = min(cap, _round_up(R, 8))
        est = 2 * (tm_try * K * xb + K * tn * 2 + tm_try * tn * 4)
        if has_res:
            est += 2 * tm_try * tn * 4
        if est <= budget * 3 // 4:
            tm_cap = cap
            break
    tm, Rp = _choose_tile(R, tm_cap, 8)

    x_in, r_in, w_in, b_in = x, residual, w, b
    if Rp != R:                                    # fallback paths; not hit in this model
        x_in = jnp.pad(x_in, ((0, Rp - R), (0, 0)))
        if has_res:
            r_in = jnp.pad(r_in, ((0, Rp - R), (0, 0)))
    if Np != N:
        w_in = jnp.pad(w_in, ((0, 0), (0, Np - N)))
        if has_bias:
            b_in = jnp.pad(b_in, ((0, 0), (0, Np - N)))
        if has_res:
            r_in = jnp.pad(r_in, ((0, 0), (0, Np - N)))

    operands = [x_in, w_in]
    in_specs = [pl.BlockSpec((tm, K), lambda i, j: (i, 0)),
                pl.BlockSpec((K, tn), lambda i, j: (0, j))]
    if has_bias:
        operands.append(b_in)
        in_specs.append(pl.BlockSpec((1, tn), lambda i, j: (0, j)))
    if has_ln:
        operands += [ln_g, ln_b]
        in_specs += [pl.BlockSpec((1, K), lambda i, j: (0, 0)),
                     pl.BlockSpec((1, K), lambda i, j: (0, 0))]
    if has_res:
        operands.append(r_in)
        in_specs.append(pl.BlockSpec((tm, tn), lambda i, j: (i, j)))

    flops = 2 * Rp * K * Np
    transcendentals = Rp * Np if activation == "quickgelu" else 0
    bytes_acc = (Rp * K * xb + K * Np * 2 + Rp * Np * jnp.dtype(out_dtype).itemsize
                 + (Rp * Np * 4 if has_res else 0))

    out = pl.pallas_call(
        _make_fused_matmul_kernel(has_bias, has_ln, has_res, activation, eps),
        out_shape=jax.ShapeDtypeStruct((Rp, Np), out_dtype),
        grid=(Rp // tm, Np // tn),
        in_specs=in_specs,
        out_specs=pl.BlockSpec((tm, tn), lambda i, j: (i, j)),
        compiler_params=pltpu.CompilerParams(
            dimension_semantics=("parallel", "parallel"),
            vmem_limit_bytes=budget),
        cost_estimate=pl.CostEstimate(flops=flops, transcendentals=transcendentals,
                                      bytes_accessed=bytes_acc),
    )(*operands)
    if Rp != R or Np != N:
        out = out[:R, :N]
    return out


# ----------------------------- standalone LayerNorm (ln_pre) -----------------------------

def _layernorm_kernel(x_ref, g_ref, b_ref, o_ref, *, eps):
    x = x_ref[...].astype(jnp.float32)
    mu = jnp.mean(x, axis=-1, keepdims=True)
    var = jnp.mean(jnp.square(x - mu), axis=-1, keepdims=True)
    y = (x - mu) * jax.lax.rsqrt(var + eps)
    o_ref[...] = (y * g_ref[...] + b_ref[...]).astype(o_ref.dtype)


def layernorm(x, gamma_row, beta_row, eps=1e-5):
    """Row-tiled LN: x [R, D] -> [R, D] f32.  gamma_row/beta_row are (1, D) f32 (prepped)."""
    R, D = x.shape
    tr, Rp = _choose_tile(R, 512, 8)
    xi = jnp.pad(x, ((0, Rp - R), (0, 0))) if Rp != R else x
    out = pl.pallas_call(
        functools.partial(_layernorm_kernel, eps=eps),
        out_shape=jax.ShapeDtypeStruct((Rp, D), jnp.float32),
        grid=(Rp // tr,),
        in_specs=[pl.BlockSpec((tr, D), lambda i: (i, 0)),
                  pl.BlockSpec((1, D), lambda i: (0, 0)),
                  pl.BlockSpec((1, D), lambda i: (0, 0))],
        out_specs=pl.BlockSpec((tr, D), lambda i: (i, 0)),
        compiler_params=pltpu.CompilerParams(
            dimension_semantics=("parallel",),
            vmem_limit_bytes=_vmem_budget_bytes()),
        cost_estimate=pl.CostEstimate(flops=8 * Rp * D, transcendentals=Rp,
                                      bytes_accessed=2 * Rp * D * 4),
    )(xi, gamma_row, beta_row)
    return out[:R] if Rp != R else out


# ----------------------------- attention kernel -----------------------------
# q/k/v: [B, S_pad, D] bf16 (head-interleaved).  Grid = (batch-blocks, head-blocks);
# each step handles (Bb, S_pad, Hb*Dh).  Softmax scale pre-folded into w_q.  Padded key
# positions (>= valid_len) are masked.  Per-head outputs written directly into o_ref slices.

def _attn_kernel(q_ref, k_ref, v_ref, o_ref, *, hb, dh, valid_len, seq_pad):
    q = q_ref[...]
    k = k_ref[...]
    v = v_ref[...]
    mask = None
    if seq_pad > valid_len:
        key_idx = jax.lax.broadcasted_iota(jnp.int32, (1, 1, seq_pad), 2)
        mask = key_idx < valid_len
    for h in range(hb):
        sl = slice(h * dh, (h + 1) * dh)
        s = jnp.einsum("bqd,bkd->bqk", q[:, :, sl], k[:, :, sl],
                       preferred_element_type=jnp.float32)
        if mask is not None:
            s = jnp.where(mask, s, -1e30)
        m = jnp.max(s, axis=-1, keepdims=True)
        p = jnp.exp(s - m)
        l = jnp.sum(p, axis=-1, keepdims=True)
        p = p / l                                # exact reciprocal (accuracy over many layers)
        o = jnp.einsum("bqk,bkd->bqd", p.astype(jnp.bfloat16), v[:, :, sl],
                       preferred_element_type=jnp.float32)
        o_ref[:, :, sl] = o.astype(o_ref.dtype)


def mha(q, k, v, *, heads, valid_len):
    B, S, D = q.shape
    dh = D // heads
    budget = _vmem_budget_bytes()

    # Head block: smallest divisor of heads that is lane-dense and sizeable (>= 512 lanes),
    # else all heads (blk == D == full last dim -> always layout-legal).
    hb = heads
    for cand in range(1, heads + 1):
        if heads % cand == 0 and cand * dh >= 512 and (cand * dh) % 128 == 0:
            hb = cand
            break
    blk = hb * dh

    # Batch block: largest divisor of B (<= 8) whose per-step footprint fits comfortably.
    bb = 1
    for cand in range(1, min(B, 8) + 1):
        if B % cand:
            continue
        est = 12 * cand * S * blk + 4 * cand * S * blk + 2 * cand * S * S * 4
        if est <= budget // 2:
            bb = cand

    spec = pl.BlockSpec((bb, S, blk), lambda b, h: (b, 0, h))
    flops = 4 * B * heads * S * S * dh
    bytes_acc = 4 * B * S * D * 2
    return pl.pallas_call(
        functools.partial(_attn_kernel, hb=hb, dh=dh, valid_len=valid_len, seq_pad=S),
        out_shape=jax.ShapeDtypeStruct((B, S, D), jnp.bfloat16),
        grid=(B // bb, D // blk),
        in_specs=[spec, spec, spec],
        out_specs=spec,
        compiler_params=pltpu.CompilerParams(
            dimension_semantics=("parallel", "parallel"),
            vmem_limit_bytes=budget),
        cost_estimate=pl.CostEstimate(flops=flops, transcendentals=B * heads * S * S,
                                      bytes_accessed=bytes_acc),
    )(q, k, v)


# ----------------------------- parameters -----------------------------

def init_params(key, *, in_ch, patch, width, heads, layers, mlp_dim, seq, out_dim):
    ks = list(jax.random.split(key, 8 + 12 * layers))
    it = iter(ks)
    s = 0.02

    def rnd(shape):
        return (s * jax.random.normal(next(it), shape)).astype(jnp.float32)

    p = {
        "conv_w": rnd((width, in_ch, patch, patch)),      # PyTorch conv weight layout
        "class_emb": rnd((width,)),
        "pos_emb": rnd((seq, width)),
        "ln_pre_g": jnp.ones((width,), jnp.float32),
        "ln_pre_b": jnp.zeros((width,), jnp.float32),
        "ln_post_g": jnp.ones((width,), jnp.float32),
        "ln_post_b": jnp.zeros((width,), jnp.float32),
        "proj": rnd((width, out_dim)),
        "blocks": [],
    }
    for _ in range(layers):
        p["blocks"].append({
            "ln1_g": jnp.ones((width,), jnp.float32),
            "ln1_b": jnp.zeros((width,), jnp.float32),
            "w_q": rnd((width, width)), "b_q": jnp.zeros((width,), jnp.float32),
            "w_k": rnd((width, width)), "b_k": jnp.zeros((width,), jnp.float32),
            "w_v": rnd((width, width)), "b_v": jnp.zeros((width,), jnp.float32),
            "w_out": rnd((width, width)), "b_out": jnp.zeros((width,), jnp.float32),
            "ln2_g": jnp.ones((width,), jnp.float32),
            "ln2_b": jnp.zeros((width,), jnp.float32),
            "w_fc": rnd((width, mlp_dim)), "b_fc": jnp.zeros((mlp_dim,), jnp.float32),
            "w_pr": rnd((mlp_dim, width)), "b_pr": jnp.zeros((width,), jnp.float32),
        })
    return p


def prepare_params(p, *, heads):
    """One-time weight prep: bf16 casts, bias/LN reshapes, QKV concat, scale fold."""
    width = p["conv_w"].shape[0]
    scale = (width // heads) ** -0.5

    def row(v):
        return v.reshape(1, -1).astype(jnp.float32)

    prep = {
        "patch_w": p["conv_w"].reshape(width, -1).T.astype(jnp.bfloat16),   # [C*P*P, width]
        "class_emb": p["class_emb"].astype(jnp.float32),
        "pos_emb": p["pos_emb"].astype(jnp.float32),
        "ln_pre_g": row(p["ln_pre_g"]), "ln_pre_b": row(p["ln_pre_b"]),
        "ln_post_g": row(p["ln_post_g"]), "ln_post_b": row(p["ln_post_b"]),
        "proj": p["proj"].astype(jnp.bfloat16),
        "blocks": [],
    }
    for blk in p["blocks"]:
        w_qkv = jnp.concatenate([blk["w_q"] * scale, blk["w_k"], blk["w_v"]], axis=1)
        b_qkv = jnp.concatenate([blk["b_q"] * scale, blk["b_k"], blk["b_v"]], axis=0)
        prep["blocks"].append({
            "ln1_g": row(blk["ln1_g"]), "ln1_b": row(blk["ln1_b"]),
            "w_qkv": w_qkv.astype(jnp.bfloat16), "b_qkv": row(b_qkv),
            "w_out": blk["w_out"].astype(jnp.bfloat16), "b_out": row(blk["b_out"]),
            "ln2_g": row(blk["ln2_g"]), "ln2_b": row(blk["ln2_b"]),
            "w_fc": blk["w_fc"].astype(jnp.bfloat16), "b_fc": row(blk["b_fc"]),
            "w_pr": blk["w_pr"].astype(jnp.bfloat16), "b_pr": row(blk["b_pr"]),
        })
    return prep


# ----------------------------- model (CLIP visual encoder) -----------------------------

def residual_block(x, blk, *, heads, valid_len):
    B, S, D = x.shape
    xf = x.reshape(B * S, D)                                   # f32 residual stream

    # --- attention branch: LN1 + fused QKV projection (scale pre-folded) ---
    qkv = fused_matmul(xf, blk["w_qkv"], blk["b_qkv"],
                       ln_g=blk["ln1_g"], ln_b=blk["ln1_b"],
                       out_dtype=jnp.bfloat16).reshape(B, S, 3 * D)
    q, k, v = qkv[..., :D], qkv[..., D:2 * D], qkv[..., 2 * D:]
    a = mha(q, k, v, heads=heads, valid_len=valid_len)         # [B, S, D] bf16
    x1 = fused_matmul(a.reshape(B * S, D), blk["w_out"], blk["b_out"],
                      residual=xf, out_dtype=jnp.float32)      # out-proj + residual fused

    # --- MLP branch: LN2 + FC + QuickGELU fused; proj + residual fused ---
    h = fused_matmul(x1, blk["w_fc"], blk["b_fc"], ln_g=blk["ln2_g"], ln_b=blk["ln2_b"],
                     activation="quickgelu", out_dtype=jnp.bfloat16)
    x2 = fused_matmul(h, blk["w_pr"], blk["b_pr"], residual=x1, out_dtype=jnp.float32)
    return x2.reshape(B, S, D)


def encode_image(x, prep, *, patch, heads):
    """x: [B, C, H, W] (NCHW, like the PyTorch module)."""
    B, C, H, W = x.shape
    gh, gw = H // patch, W // patch
    width = prep["patch_w"].shape[1]

    # conv1 as patch extraction (glue) + Pallas matmul.
    patches = x.reshape(B, C, gh, patch, gw, patch)
    patches = patches.transpose(0, 2, 4, 1, 3, 5).reshape(B * gh * gw, C * patch * patch)
    tok = fused_matmul(patches, prep["patch_w"], out_dtype=jnp.float32)
    tok = tok.reshape(B, gh * gw, width)

    # class token + positional embedding, then persistent sublane padding of S.
    cls = jnp.broadcast_to(prep["class_emb"].reshape(1, 1, width), (B, 1, width))
    xx = jnp.concatenate([cls, tok], axis=1) + prep["pos_emb"][None]
    S = xx.shape[1]
    S_pad = _round_up(S, 8)
    if S_pad != S:
        xx = jnp.pad(xx, ((0, 0), (0, S_pad - S), (0, 0)))     # padded keys masked in attention

    xx = layernorm(xx.reshape(B * S_pad, width), prep["ln_pre_g"], prep["ln_pre_b"])
    xx = xx.reshape(B, S_pad, width)

    for blk in prep["blocks"]:
        xx = residual_block(xx, blk, heads=heads, valid_len=S)

    # CLS token -> ln_post fused into the final projection matmul.
    cls_tok = xx[:, 0, :]
    return fused_matmul(cls_tok, prep["proj"],
                        ln_g=prep["ln_post_g"], ln_b=prep["ln_post_b"],
                        out_dtype=jnp.float32)


# ----------------------------- pure-JAX f32 reference for sanity -----------------------------

def _ref_encode_image(x, p, *, patch, heads):
    def ln(x, g, b, eps=1e-5):
        m = x.mean(-1, keepdims=True)
        v = ((x - m) ** 2).mean(-1, keepdims=True)
        return (x - m) / jnp.sqrt(v + eps) * g + b

    B, C, H, W = x.shape
    gh, gw = H // patch, W // patch
    width = p["conv_w"].shape[0]
    patches = x.reshape(B, C, gh, patch, gw, patch).transpose(0, 2, 4, 1, 3, 5)
    patches = patches.reshape(B * gh * gw, C * patch * patch)
    tok = (patches @ p["conv_w"].reshape(width, -1).T).reshape(B, gh * gw, width)
    cls = jnp.broadcast_to(p["class_emb"].reshape(1, 1, width), (B, 1, width))
    xx = jnp.concatenate([cls, tok], axis=1) + p["pos_emb"][None]
    xx = ln(xx, p["ln_pre_g"], p["ln_pre_b"])
    S = xx.shape[1]
    dh = width // heads
    for blk in p["blocks"]:
        h = ln(xx, blk["ln1_g"], blk["ln1_b"])
        q = (h @ blk["w_q"] + blk["b_q"]).reshape(B, S, heads, dh)
        k = (h @ blk["w_k"] + blk["b_k"]).reshape(B, S, heads, dh)
        v = (h @ blk["w_v"] + blk["b_v"]).reshape(B, S, heads, dh)
        s = jnp.einsum("bqhd,bkhd->bhqk", q, k) * dh ** -0.5
        a = jax.nn.softmax(s, axis=-1)
        o = jnp.einsum("bhqk,bkhd->bqhd", a, v).reshape(B, S, width)
        xx = xx + (o @ blk["w_out"] + blk["b_out"])
        h = ln(xx, blk["ln2_g"], blk["ln2_b"])
        h = h @ blk["w_fc"] + blk["b_fc"]
        h = h * jax.nn.sigmoid(1.702 * h)
        xx = xx + (h @ blk["w_pr"] + blk["b_pr"])
    c = ln(xx[:, 0, :], p["ln_post_g"], p["ln_post_b"])
    return c @ p["proj"]


# ----------------------------- main -----------------------------

if __name__ == "__main__":
    # small synthetic CLIP visual config
    B, C, H, W = 2, 3, 16, 16
    PATCH = 8
    WIDTH = 32
    HEADS = 4
    LAYERS = 2
    MLP = 4 * WIDTH
    OUT_DIM = 16
    SEQ = (H // PATCH) * (W // PATCH) + 1

    key = jax.random.PRNGKey(0)
    kx, kp = jax.random.split(key)
    x = jax.random.normal(kx, (B, C, H, W), dtype=jnp.float32)
    params = init_params(kp, in_ch=C, patch=PATCH, width=WIDTH, heads=HEADS,
                         layers=LAYERS, mlp_dim=MLP, seq=SEQ, out_dim=OUT_DIM)

    prep = prepare_params(params, heads=HEADS)      # one-time weight prep (outside forward)
    encode = jax.jit(functools.partial(encode_image, patch=PATCH, heads=HEADS))
    out = encode(x, prep)
    out = jax.block_until_ready(out)

    ref = _ref_encode_image(x, params, patch=PATCH, heads=HEADS)
    assert out.shape == (B, OUT_DIM)
    # bf16 MXU inputs vs f32 reference -> slightly looser tolerance (documented deviation)
    assert jnp.allclose(out, ref, atol=2e-2, rtol=2e-2), "mismatch vs JAX reference"

    print("KERNEL_OK")
</pallas_src>

<mosaic_0001>
module attributes {stable_mosaic.version = 11 : i64} {
  func.func @kernel(%arg0: i32, %arg1: i32, %arg2: memref<16x32xf32, #tpu.memory_space<vmem>>, %arg3: memref<32x96xbf16, #tpu.memory_space<vmem>>, %arg4: memref<1x96xf32, #tpu.memory_space<vmem>>, %arg5: memref<1x32xf32, #tpu.memory_space<vmem>>, %arg6: memref<1x32xf32, #tpu.memory_space<vmem>>, %arg7: memref<16x96xbf16, #tpu.memory_space<vmem>>) attributes {dimension_semantics = [#tpu.dimension_semantics<parallel>, #tpu.dimension_semantics<parallel>], iteration_bounds = array<i64: 1, 1>, scalar_prefetch = 0 : i64, scratch_operands = 0 : i64, tpu.core_type = #tpu.core_type<tc>, window_params = [{transform_indices = @transform_0, window_bounds = array<i64: 16, 32>}, {transform_indices = @transform_1, window_bounds = array<i64: 32, 96>}, {transform_indices = @transform_2, window_bounds = array<i64: 1, 96>}, {pipeline_mode = #tpu.pipeline_mode<synchronous>, transform_indices = @transform_3, window_bounds = array<i64: 1, 32>}, {pipeline_mode = #tpu.pipeline_mode<synchronous>, transform_indices = @transform_4, window_bounds = array<i64: 1, 32>}, {transform_indices = @transform_5, window_bounds = array<i64: 16, 96>}]} {
    %c0 = arith.constant 0 : index
    %c0_0 = arith.constant 0 : index
    %0 = vector.load %arg2[%c0, %c0_0] : memref<16x32xf32, #tpu.memory_space<vmem>>, vector<16x32xf32>
    %cst = arith.constant dense<0.000000e+00> : vector<16xf32>
    %1 = vector.multi_reduction <add>, %0, %cst [1] : vector<16x32xf32> to vector<16xf32>
    %2 = vector.shape_cast %1 : vector<16xf32> to vector<16x1xf32>
    %cst_1 = arith.constant 3.200000e+01 : f32
    %3 = vector.broadcast %cst_1 : f32 to vector<16x1xf32>
    %4 = arith.divf %2, %3 : vector<16x1xf32>
    %5 = vector.broadcast %4 : vector<16x1xf32> to vector<16x32xf32>
    %6 = arith.subf %0, %5 : vector<16x32xf32>
    %7 = arith.mulf %6, %6 : vector<16x32xf32>
    %cst_2 = arith.constant dense<0.000000e+00> : vector<16xf32>
    %8 = vector.multi_reduction <add>, %7, %cst_2 [1] : vector<16x32xf32> to vector<16xf32>
    %9 = vector.shape_cast %8 : vector<16xf32> to vector<16x1xf32>
    %cst_3 = arith.constant 3.200000e+01 : f32
    %10 = vector.broadcast %cst_3 : f32 to vector<16x1xf32>
    %11 = arith.divf %9, %10 : vector<16x1xf32>
    %12 = vector.broadcast %4 : vector<16x1xf32> to vector<16x32xf32>
    %13 = arith.subf %0, %12 : vector<16x32xf32>
    %cst_4 = arith.constant 9.99999974E-6 : f32
    %14 = vector.broadcast %cst_4 : f32 to vector<16x1xf32>
    %15 = arith.addf %11, %14 : vector<16x1xf32>
    %16 = math.rsqrt %15 : vector<16x1xf32>
    %17 = vector.broadcast %16 : vector<16x1xf32> to vector<16x32xf32>
    %18 = arith.mulf %13, %17 : vector<16x32xf32>
    %c0_5 = arith.constant 0 : index
    %c0_6 = arith.constant 0 : index
    %19 = vector.load %arg5[%c0_5, %c0_6] : memref<1x32xf32, #tpu.memory_space<vmem>>, vector<1x32xf32>
    %20 = vector.broadcast %19 : vector<1x32xf32> to vector<16x32xf32>
    %21 = arith.mulf %18, %20 : vector<16x32xf32>
    %c0_7 = arith.constant 0 : index
    %c0_8 = arith.constant 0 : index
    %22 = vector.load %arg6[%c0_7, %c0_8] : memref<1x32xf32, #tpu.memory_space<vmem>>, vector<1x32xf32>
    %23 = vector.broadcast %22 : vector<1x32xf32> to vector<16x32xf32>
    %24 = arith.addf %21, %23 : vector<16x32xf32>
    %25 = arith.truncf %24 : vector<16x32xf32> to vector<16x32xbf16>
    %c0_9 = arith.constant 0 : index
    %c0_10 = arith.constant 0 : index
    %26 = vector.load %arg3[%c0_9, %c0_10] : memref<32x96xbf16, #tpu.memory_space<vmem>>, vector<32x96xbf16>
    %cst_11 = arith.constant dense<0.000000e+00> : vector<16x96xf32>
    %27 = tpu.matmul %25, %26, %cst_11 {dimension_numbers = #tpu.dot_dimension_numbers<[1], [0], [0], [1], [0, 0, 1, 1], [], []>} : vector<16x32xbf16>, vector<32x96xbf16>, vector<16x96xf32> -> vector<16x96xf32>
    %c0_12 = arith.constant 0 : index
    %c0_13 = arith.constant 0 : index
    %28 = vector.load %arg4[%c0_12, %c0_13] : memref<1x96xf32, #tpu.memory_space<vmem>>, vector<1x96xf32>
    %29 = vector.broadcast %28 : vector<1x96xf32> to vector<16x96xf32>
    %30 = arith.addf %27, %29 : vector<16x96xf32>
    %31 = arith.truncf %30 : vector<16x96xf32> to vector<16x96xbf16>
    %c0_14 = arith.constant 0 : index
    %c0_15 = arith.constant 0 : index
    %32 = vector.load %arg7[%c0_14, %c0_15] : memref<16x96xbf16, #tpu.memory_space<vmem>>, vector<16x96xbf16>
    tpu.vector_store %arg7[%c0_14, %c0_15], %31 {strides = array<i32>} : memref<16x96xbf16, #tpu.memory_space<vmem>>, vector<16x96xbf16>,
    return
  }
  func.func @transform_0(%arg0: i32, %arg1: i32) -> (i32, i32) {
    %c0_i32 = arith.constant 0 : i32
    %c0_i32_0 = arith.constant 0 : i32
    return %arg0, %c0_i32 : i32, i32
  }
  func.func @transform_1(%arg0: i32, %arg1: i32) -> (i32, i32) {
    %c0_i32 = arith.constant 0 : i32
    %c0_i32_0 = arith.constant 0 : i32
    return %c0_i32, %arg1 : i32, i32
  }
  func.func @transform_2(%arg0: i32, %arg1: i32) -> (i32, i32) {
    %c0_i32 = arith.constant 0 : i32
    %c0_i32_0 = arith.constant 0 : i32
    return %c0_i32, %arg1 : i32, i32
  }
  func.func @transform_3(%arg0: i32, %arg1: i32) -> (i32, i32) {
    %c0_i32 = arith.constant 0 : i32
    %c0_i32_0 = arith.constant 0 : i32
    %c0_i32_1 = arith.constant 0 : i32
    return %c0_i32, %c0_i32_0 : i32, i32
  }
  func.func @transform_4(%arg0: i32, %arg1: i32) -> (i32, i32) {
    %c0_i32 = arith.constant 0 : i32
    %c0_i32_0 = arith.constant 0 : i32
    %c0_i32_1 = arith.constant 0 : i32
    return %c0_i32, %c0_i32_0 : i32, i32
  }
  func.func @transform_5(%arg0: i32, %arg1: i32) -> (i32, i32) {
    %c0_i32 = arith.constant 0 : i32
    return %arg0, %arg1 : i32, i32
  }
}

module attributes {stable_mosaic.version = 11 : i64} {
  func.func @kernel(%arg0: i32, %arg1: i32, %arg2: memref<8x192xf32, #tpu.memory_space<vmem>>, %arg3: memref<192x32xbf16, #tpu.memory_space<vmem>>, %arg4: memref<8x32xf32, #tpu.memory_space<vmem>>) attributes {dimension_semantics = [#tpu.dimension_semantics<parallel>, #tpu.dimension_semantics<parallel>], iteration_bounds = array<i64: 1, 1>, scalar_prefetch = 0 : i64, scratch_operands = 0 : i64, tpu.core_type = #tpu.core_type<tc>, window_params = [{transform_indices = @transform_0, window_bounds = array<i64: 8, 192>}, {transform_indices = @transform_1, window_bounds = array<i64: 192, 32>}, {transform_indices = @transform_2, window_bounds = array<i64: 8, 32>}]} {
    %c0 = arith.constant 0 : index
    %c0_0 = arith.constant 0 : index
    %0 = vector.load %arg2[%c0, %c0_0] : memref<8x192xf32, #tpu.memory_space<vmem>>, vector<8x192xf32>
    %1 = arith.truncf %0 : vector<8x192xf32> to vector<8x192xbf16>
    %c0_1 = arith.constant 0 : index
    %c0_2 = arith.constant 0 : index
    %2 = vector.load %arg3[%c0_1, %c0_2] : memref<192x32xbf16, #tpu.memory_space<vmem>>, vector<192x32xbf16>
    %cst = arith.constant dense<0.000000e+00> : vector<8x32xf32>
    %3 = tpu.matmul %1, %2, %cst {dimension_numbers = #tpu.dot_dimension_numbers<[1], [0], [0], [1], [0, 0, 1, 1], [], []>} : vector<8x192xbf16>, vector<192x32xbf16>, vector<8x32xf32> -> vector<8x32xf32>
    %c0_3 = arith.constant 0 : index
    %c0_4 = arith.constant 0 : index
    %4 = vector.load %arg4[%c0_3, %c0_4] : memref<8x32xf32, #tpu.memory_space<vmem>>, vector<8x32xf32>
    tpu.vector_store %arg4[%c0_3, %c0_4], %3 {strides = array<i32>} : memref<8x32xf32, #tpu.memory_space<vmem>>, vector<8x32xf32>,
    return
  }
  func.func @transform_0(%arg0: i32, %arg1: i32) -> (i32, i32) {
    %c0_i32 = arith.constant 0 : i32
    %c0_i32_0 = arith.constant 0 : i32
    return %arg0, %c0_i32 : i32, i32
  }
  func.func @transform_1(%arg0: i32, %arg1: i32) -> (i32, i32) {
    %c0_i32 = arith.constant 0 : i32
    %c0_i32_0 = arith.constant 0 : i32
    return %c0_i32, %arg1 : i32, i32
  }
  func.func @transform_2(%arg0: i32, %arg1: i32) -> (i32, i32) {
    %c0_i32 = arith.constant 0 : i32
    return %arg0, %arg1 : i32, i32
  }
}

module attributes {stable_mosaic.version = 11 : i64} {
  func.func @_layernorm_kernel(%arg0: i32, %arg1: memref<16x32xf32, #tpu.memory_space<vmem>>, %arg2: memref<1x32xf32, #tpu.memory_space<vmem>>, %arg3: memref<1x32xf32, #tpu.memory_space<vmem>>, %arg4: memref<16x32xf32, #tpu.memory_space<vmem>>) attributes {dimension_semantics = [#tpu.dimension_semantics<parallel>], iteration_bounds = array<i64: 1>, scalar_prefetch = 0 : i64, scratch_operands = 0 : i64, tpu.core_type = #tpu.core_type<tc>, window_params = [{transform_indices = @transform_0, window_bounds = array<i64: 16, 32>}, {pipeline_mode = #tpu.pipeline_mode<synchronous>, transform_indices = @transform_1, window_bounds = array<i64: 1, 32>}, {pipeline_mode = #tpu.pipeline_mode<synchronous>, transform_indices = @transform_2, window_bounds = array<i64: 1, 32>}, {transform_indices = @transform_3, window_bounds = array<i64: 16, 32>}]} {
    %c0 = arith.constant 0 : index
    %c0_0 = arith.constant 0 : index
    %0 = vector.load %arg1[%c0, %c0_0] : memref<16x32xf32, #tpu.memory_space<vmem>>, vector<16x32xf32>
    %cst = arith.constant dense<0.000000e+00> : vector<16xf32>
    %1 = vector.multi_reduction <add>, %0, %cst [1] : vector<16x32xf32> to vector<16xf32>
    %2 = vector.shape_cast %1 : vector<16xf32> to vector<16x1xf32>
    %cst_1 = arith.constant 3.200000e+01 : f32
    %3 = vector.broadcast %cst_1 : f32 to vector<16x1xf32>
    %4 = arith.divf %2, %3 : vector<16x1xf32>
    %5 = vector.broadcast %4 : vector<16x1xf32> to vector<16x32xf32>
    %6 = arith.subf %0, %5 : vector<16x32xf32>
    %7 = arith.mulf %6, %6 : vector<16x32xf32>
    %cst_2 = arith.constant dense<0.000000e+00> : vector<16xf32>
    %8 = vector.multi_reduction <add>, %7, %cst_2 [1] : vector<16x32xf32> to vector<16xf32>
    %9 = vector.shape_cast %8 : vector<16xf32> to vector<16x1xf32>
    %cst_3 = arith.constant 3.200000e+01 : f32
    %10 = vector.broadcast %cst_3 : f32 to vector<16x1xf32>
    %11 = arith.divf %9, %10 : vector<16x1xf32>
    %12 = vector.broadcast %4 : vector<16x1xf32> to vector<16x32xf32>
    %13 = arith.subf %0, %12 : vector<16x32xf32>
    %cst_4 = arith.constant 9.99999974E-6 : f32
    %14 = vector.broadcast %cst_4 : f32 to vector<16x1xf32>
    %15 = arith.addf %11, %14 : vector<16x1xf32>
    %16 = math.rsqrt %15 : vector<16x1xf32>
    %17 = vector.broadcast %16 : vector<16x1xf32> to vector<16x32xf32>
    %18 = arith.mulf %13, %17 : vector<16x32xf32>
    %c0_5 = arith.constant 0 : index
    %c0_6 = arith.constant 0 : index
    %19 = vector.load %arg2[%c0_5, %c0_6] : memref<1x32xf32, #tpu.memory_space<vmem>>, vector<1x32xf32>
    %20 = vector.broadcast %19 : vector<1x32xf32> to vector<16x32xf32>
    %21 = arith.mulf %18, %20 : vector<16x32xf32>
    %c0_7 = arith.constant 0 : index
    %c0_8 = arith.constant 0 : index
    %22 = vector.load %arg3[%c0_7, %c0_8] : memref<1x32xf32, #tpu.memory_space<vmem>>, vector<1x32xf32>
    %23 = vector.broadcast %22 : vector<1x32xf32> to vector<16x32xf32>
    %24 = arith.addf %21, %23 : vector<16x32xf32>
    %c0_9 = arith.constant 0 : index
    %c0_10 = arith.constant 0 : index
    %25 = vector.load %arg4[%c0_9, %c0_10] : memref<16x32xf32, #tpu.memory_space<vmem>>, vector<16x32xf32>
    tpu.vector_store %arg4[%c0_9, %c0_10], %24 {strides = array<i32>} : memref<16x32xf32, #tpu.memory_space<vmem>>, vector<16x32xf32>,
    return
  }
  func.func @transform_0(%arg0: i32) -> (i32, i32) {
    %c0_i32 = arith.constant 0 : i32
    %c0_i32_0 = arith.constant 0 : i32
    return %arg0, %c0_i32 : i32, i32
  }
  func.func @transform_1(%arg0: i32) -> (i32, i32) {
    %c0_i32 = arith.constant 0 : i32
    %c0_i32_0 = arith.constant 0 : i32
    %c0_i32_1 = arith.constant 0 : i32
    return %c0_i32, %c0_i32_0 : i32, i32
  }
  func.func @transform_2(%arg0: i32) -> (i32, i32) {
    %c0_i32 = arith.constant 0 : i32
    %c0_i32_0 = arith.constant 0 : i32
    %c0_i32_1 = arith.constant 0 : i32
    return %c0_i32, %c0_i32_0 : i32, i32
  }
  func.func @transform_3(%arg0: i32) -> (i32, i32) {
    %c0_i32 = arith.constant 0 : i32
    %c0_i32_0 = arith.constant 0 : i32
    return %arg0, %c0_i32 : i32, i32
  }
}

module attributes {stable_mosaic.version = 11 : i64} {
  func.func @_attn_kernel(%arg0: i32, %arg1: i32, %arg2: memref<2x8x32xbf16, #tpu.memory_space<vmem>>, %arg3: memref<2x8x32xbf16, #tpu.memory_space<vmem>>, %arg4: memref<2x8x32xbf16, #tpu.memory_space<vmem>>, %arg5: memref<2x8x32xbf16, #tpu.memory_space<vmem>>) attributes {dimension_semantics = [#tpu.dimension_semantics<parallel>, #tpu.dimension_semantics<parallel>], iteration_bounds = array<i64: 1, 1>, scalar_prefetch = 0 : i64, scratch_operands = 0 : i64, tpu.core_type = #tpu.core_type<tc>, window_params = [{transform_indices = @transform_0, window_bounds = array<i64: 2, 8, 32>}, {transform_indices = @transform_1, window_bounds = array<i64: 2, 8, 32>}, {transform_indices = @transform_2, window_bounds = array<i64: 2, 8, 32>}, {transform_indices = @transform_3, window_bounds = array<i64: 2, 8, 32>}]} {
    %c0 = arith.constant 0 : index
    %c0_0 = arith.constant 0 : index
    %c0_1 = arith.constant 0 : index
    %0 = vector.load %arg2[%c0, %c0_0, %c0_1] : memref<2x8x32xbf16, #tpu.memory_space<vmem>>, vector<2x8x32xbf16>
    %c0_2 = arith.constant 0 : index
    %c0_3 = arith.constant 0 : index
    %c0_4 = arith.constant 0 : index
    %1 = vector.load %arg3[%c0_2, %c0_3, %c0_4] : memref<2x8x32xbf16, #tpu.memory_space<vmem>>, vector<2x8x32xbf16>
    %c0_5 = arith.constant 0 : index
    %c0_6 = arith.constant 0 : index
    %c0_7 = arith.constant 0 : index
    %2 = vector.load %arg4[%c0_5, %c0_6, %c0_7] : memref<2x8x32xbf16, #tpu.memory_space<vmem>>, vector<2x8x32xbf16>
    %3 = tpu.iota {dimensions = array<i32: 2>} : vector<1x1x8xi32>
    %c5_i32 = arith.constant 5 : i32
    %4 = vector.broadcast %c5_i32 : i32 to vector<1x1x8xi32>
    %5 = arith.cmpi slt, %3, %4 : vector<1x1x8xi32>
    %6 = vector.extract_strided_slice %0 {offsets = [0, 0, 0], sizes = [2, 8, 8], strides = [1, 1, 1]} : vector<2x8x32xbf16> to vector<2x8x8xbf16>
    %7 = vector.extract_strided_slice %1 {offsets = [0, 0, 0], sizes = [2, 8, 8], strides = [1, 1, 1]} : vector<2x8x32xbf16> to vector<2x8x8xbf16>
    "tpu.trace_start"() <{level = 10 : i32, message = "bqd,bkd->bqk"}> : () -> ()
    %cst = arith.constant dense<0.000000e+00> : vector<2x8x8xf32>
    %8 = tpu.matmul %6, %7, %cst {dimension_numbers = #tpu.dot_dimension_numbers<[2], [2], [1], [1], [0, 0, 0, 1, 1, 1], [0], [0]>} : vector<2x8x8xbf16>, vector<2x8x8xbf16>, vector<2x8x8xf32> -> vector<2x8x8xf32>
    %cst_8 = arith.constant -1.000000e+30 : f32
    "tpu.trace_stop"() : () -> ()
    %9 = vector.shape_cast %5 : vector<1x1x8xi1> to vector<1x1x8xi1>
    %10 = vector.broadcast %9 : vector<1x1x8xi1> to vector<2x8x8xi1>
    %11 = vector.broadcast %cst_8 : f32 to vector<2x8x8xf32>
    %12 = arith.select %10, %8, %11 : vector<2x8x8xi1>, vector<2x8x8xf32>
    %cst_9 = arith.constant dense<0xFF800000> : vector<2x8xf32>
    %13 = vector.multi_reduction <maximumf>, %12, %cst_9 [2] : vector<2x8x8xf32> to vector<2x8xf32>
    %14 = vector.shape_cast %13 : vector<2x8xf32> to vector<2x8x1xf32>
    %15 = vector.broadcast %14 : vector<2x8x1xf32> to vector<2x8x8xf32>
    %16 = arith.subf %12, %15 : vector<2x8x8xf32>
    %17 = math.exp %16 : vector<2x8x8xf32>
    %cst_10 = arith.constant dense<0.000000e+00> : vector<2x8xf32>
    %18 = vector.multi_reduction <add>, %17, %cst_10 [2] : vector<2x8x8xf32> to vector<2x8xf32>
    %19 = vector.shape_cast %18 : vector<2x8xf32> to vector<2x8x1xf32>
    %20 = vector.broadcast %19 : vector<2x8x1xf32> to vector<2x8x8xf32>
    %21 = arith.divf %17, %20 : vector<2x8x8xf32>
    %22 = arith.truncf %21 : vector<2x8x8xf32> to vector<2x8x8xbf16>
    %23 = vector.extract_strided_slice %2 {offsets = [0, 0, 0], sizes = [2, 8, 8], strides = [1, 1, 1]} : vector<2x8x32xbf16> to vector<2x8x8xbf16>
    "tpu.trace_start"() <{level = 10 : i32, message = "bqk,bkd->bqd"}> : () -> ()
    %cst_11 = arith.constant dense<0.000000e+00> : vector<2x8x8xf32>
    %24 = tpu.matmul %22, %23, %cst_11 {dimension_numbers = #tpu.dot_dimension_numbers<[2], [1], [1], [2], [0, 0, 0, 1, 1, 2], [0], [0]>} : vector<2x8x8xbf16>, vector<2x8x8xbf16>, vector<2x8x8xf32> -> vector<2x8x8xf32>
    "tpu.trace_stop"() : () -> ()
    %25 = arith.truncf %24 : vector<2x8x8xf32> to vector<2x8x8xbf16>
    %c0_12 = arith.constant 0 : index
    %c0_13 = arith.constant 0 : index
    %c0_14 = arith.constant 0 : index
    %26 = vector.load %arg5[%c0_12, %c0_13, %c0_14] : memref<2x8x32xbf16, #tpu.memory_space<vmem>>, vector<2x8x8xbf16>
    tpu.vector_store %arg5[%c0_12, %c0_13, %c0_14], %25 {strides = array<i32>} : memref<2x8x32xbf16, #tpu.memory_space<vmem>>, vector<2x8x8xbf16>,
    %27 = vector.extract_strided_slice %0 {offsets = [0, 0, 8], sizes = [2, 8, 8], strides = [1, 1, 1]} : vector<2x8x32xbf16> to vector<2x8x8xbf16>
    %28 = vector.extract_strided_slice %1 {offsets = [0, 0, 8], sizes = [2, 8, 8], strides = [1, 1, 1]} : vector<2x8x32xbf16> to vector<2x8x8xbf16>
    "tpu.trace_start"() <{level = 10 : i32, message = "bqd,bkd->bqk"}> : () -> ()
    %cst_15 = arith.constant dense<0.000000e+00> : vector<2x8x8xf32>
    %29 = tpu.matmul %27, %28, %cst_15 {dimension_numbers = #tpu.dot_dimension_numbers<[2], [2], [1], [1], [0, 0, 0, 1, 1, 1], [0], [0]>} : vector<2x8x8xbf16>, vector<2x8x8xbf16>, vector<2x8x8xf32> -> vector<2x8x8xf32>
    %cst_16 = arith.constant -1.000000e+30 : f32
    "tpu.trace_stop"() : () -> ()
    %30 = vector.shape_cast %5 : vector<1x1x8xi1> to vector<1x1x8xi1>
    %31 = vector.broadcast %30 : vector<1x1x8xi1> to vector<2x8x8xi1>
    %32 = vector.broadcast %cst_16 : f32 to vector<2x8x8xf32>
    %33 = arith.select %31, %29, %32 : vector<2x8x8xi1>, vector<2x8x8xf32>
    %cst_17 = arith.constant dense<0xFF800000> : vector<2x8xf32>
    %34 = vector.multi_reduction <maximumf>, %33, %cst_17 [2] : vector<2x8x8xf32> to vector<2x8xf32>
    %35 = vector.shape_cast %34 : vector<2x8xf32> to vector<2x8x1xf32>
    %36 = vector.broadcast %35 : vector<2x8x1xf32> to vector<2x8x8xf32>
    %37 = arith.subf %33, %36 : vector<2x8x8xf32>
    %38 = math.exp %37 : vector<2x8x8xf32>
    %cst_18 = arith.constant dense<0.000000e+00> : vector<2x8xf32>
    %39 = vector.multi_reduction <add>, %38, %cst_18 [2] : vector<2x8x8xf32> to vector<2x8xf32>
    %40 = vector.shape_cast %39 : vector<2x8xf32> to vector<2x8x1xf32>
    %41 = vector.broadcast %40 : vector<2x8x1xf32> to vector<2x8x8xf32>
    %42 = arith.divf %38, %41 : vector<2x8x8xf32>
    %43 = arith.truncf %42 : vector<2x8x8xf32> to vector<2x8x8xbf16>
    %44 = vector.extract_strided_slice %2 {offsets = [0, 0, 8], sizes = [2, 8, 8], strides = [1, 1, 1]} : vector<2x8x32xbf16> to vector<2x8x8xbf16>
    "tpu.trace_start"() <{level = 10 : i32, message = "bqk,bkd->bqd"}> : () -> ()
    %cst_19 = arith.constant dense<0.000000e+00> : vector<2x8x8xf32>
    %45 = tpu.matmul %43, %44, %cst_19 {dimension_numbers = #tpu.dot_dimension_numbers<[2], [1], [1], [2], [0, 0, 0, 1, 1, 2], [0], [0]>} : vector<2x8x8xbf16>, vector<2x8x8xbf16>, vector<2x8x8xf32> -> vector<2x8x8xf32>
    "tpu.trace_stop"() : () -> ()
    %46 = arith.truncf %45 : vector<2x8x8xf32> to vector<2x8x8xbf16>
    %c0_20 = arith.constant 0 : index
    %c0_21 = arith.constant 0 : index
    %c8 = arith.constant 8 : index
    %47 = vector.load %arg5[%c0_20, %c0_21, %c8] : memref<2x8x32xbf16, #tpu.memory_space<vmem>>, vector<2x8x8xbf16>
    tpu.vector_store %arg5[%c0_20, %c0_21, %c8], %46 {strides = array<i32>} : memref<2x8x32xbf16, #tpu.memory_space<vmem>>, vector<2x8x8xbf16>,
    %48 = vector.extract_strided_slice %0 {offsets = [0, 0, 16], sizes = [2, 8, 8], strides = [1, 1, 1]} : vector<2x8x32xbf16> to vector<2x8x8xbf16>
    %49 = vector.extract_strided_slice %1 {offsets = [0, 0, 16], sizes = [2, 8, 8], strides = [1, 1, 1]} : vector<2x8x32xbf16> to vector<2x8x8xbf16>
    "tpu.trace_start"() <{level = 10 : i32, message = "bqd,bkd->bqk"}> : () -> ()
    %cst_22 = arith.constant dense<0.000000e+00> : vector<2x8x8xf32>
    %50 = tpu.matmul %48, %49, %cst_22 {dimension_numbers = #tpu.dot_dimension_numbers<[2], [2], [1], [1], [0, 0, 0, 1, 1, 1], [0], [0]>} : vector<2x8x8xbf16>, vector<2x8x8xbf16>, vector<2x8x8xf32> -> vector<2x8x8xf32>
    %cst_23 = arith.constant -1.000000e+30 : f32
    "tpu.trace_stop"() : () -> ()
    %51 = vector.shape_cast %5 : vector<1x1x8xi1> to vector<1x1x8xi1>
    %52 = vector.broadcast %51 : vector<1x1x8xi1> to vector<2x8x8xi1>
    %53 = vector.broadcast %cst_23 : f32 to vector<2x8x8xf32>
    %54 = arith.select %52, %50, %53 : vector<2x8x8xi1>, vector<2x8x8xf32>
    %cst_24 = arith.constant dense<0xFF800000> : vector<2x8xf32>
    %55 = vector.multi_reduction <maximumf>, %54, %cst_24 [2] : vector<2x8x8xf32> to vector<2x8xf32>
    %56 = vector.shape_cast %55 : vector<2x8xf32> to vector<2x8x1xf32>
    %57 = vector.broadcast %56 : vector<2x8x1xf32> to vector<2x8x8xf32>
    %58 = arith.subf %54, %57 : vector<2x8x8xf32>
    %59 = math.exp %58 : vector<2x8x8xf32>
    %cst_25 = arith.constant dense<0.000000e+00> : vector<2x8xf32>
    %60 = vector.multi_reduction <add>, %59, %cst_25 [2] : vector<2x8x8xf32> to vector<2x8xf32>
    %61 = vector.shape_cast %60 : vector<2x8xf32> to vector<2x8x1xf32>
    %62 = vector.broadcast %61 : vector<2x8x1xf32> to vector<2x8x8xf32>
    %63 = arith.divf %59, %62 : vector<2x8x8xf32>
    %64 = arith.truncf %63 : vector<2x8x8xf32> to vector<2x8x8xbf16>
    %65 = vector.extract_strided_slice %2 {offsets = [0, 0, 16], sizes = [2, 8, 8], strides = [1, 1, 1]} : vector<2x8x32xbf16> to vector<2x8x8xbf16>
    "tpu.trace_start"() <{level = 10 : i32, message = "bqk,bkd->bqd"}> : () -> ()
    %cst_26 = arith.constant dense<0.000000e+00> : vector<2x8x8xf32>
    %66 = tpu.matmul %64, %65, %cst_26 {dimension_numbers = #tpu.dot_dimension_numbers<[2], [1], [1], [2], [0, 0, 0, 1, 1, 2], [0], [0]>} : vector<2x8x8xbf16>, vector<2x8x8xbf16>, vector<2x8x8xf32> -> vector<2x8x8xf32>
    "tpu.trace_stop"() : () -> ()
    %67 = arith.truncf %66 : vector<2x8x8xf32> to vector<2x8x8xbf16>
    %c0_27 = arith.constant 0 : index
    %c0_28 = arith.constant 0 : index
    %c16 = arith.constant 16 : index
    %68 = vector.load %arg5[%c0_27, %c0_28, %c16] : memref<2x8x32xbf16, #tpu.memory_space<vmem>>, vector<2x8x8xbf16>
    tpu.vector_store %arg5[%c0_27, %c0_28, %c16], %67 {strides = array<i32>} : memref<2x8x32xbf16, #tpu.memory_space<vmem>>, vector<2x8x8xbf16>,
    %69 = vector.extract_strided_slice %0 {offsets = [0, 0, 24], sizes = [2, 8, 8], strides = [1, 1, 1]} : vector<2x8x32xbf16> to vector<2x8x8xbf16>
    %70 = vector.extract_strided_slice %1 {offsets = [0, 0, 24], sizes = [2, 8, 8], strides = [1, 1, 1]} : vector<2x8x32xbf16> to vector<2x8x8xbf16>
    "tpu.trace_start"() <{level = 10 : i32, message = "bqd,bkd->bqk"}> : () -> ()
    %cst_29 = arith.constant dense<0.000000e+00> : vector<2x8x8xf32>
    %71 = tpu.matmul %69, %70, %cst_29 {dimension_numbers = #tpu.dot_dimension_numbers<[2], [2], [1], [1], [0, 0, 0, 1, 1, 1], [0], [0]>} : vector<2x8x8xbf16>, vector<2x8x8xbf16>, vector<2x8x8xf32> -> vector<2x8x8xf32>
    %cst_30 = arith.constant -1.000000e+30 : f32
    "tpu.trace_stop"() : () -> ()
    %72 = vector.shape_cast %5 : vector<1x1x8xi1> to vector<1x1x8xi1>
    %73 = vector.broadcast %72 : vector<1x1x8xi1> to vector<2x8x8xi1>
    %74 = vector.broadcast %cst_30 : f32 to vector<2x8x8xf32>
    %75 = arith.select %73, %71, %74 : vector<2x8x8xi1>, vector<2x8x8xf32>
    %cst_31 = arith.constant dense<0xFF800000> : vector<2x8xf32>
    %76 = vector.multi_reduction <maximumf>, %75, %cst_31 [2] : vector<2x8x8xf32> to vector<2x8xf32>
    %77 = vector.shape_cast %76 : vector<2x8xf32> to vector<2x8x1xf32>
    %78 = vector.broadcast %77 : vector<2x8x1xf32> to vector<2x8x8xf32>
    %79 = arith.subf %75, %78 : vector<2x8x8xf32>
    %80 = math.exp %79 : vector<2x8x8xf32>
    %cst_32 = arith.constant dense<0.000000e+00> : vector<2x8xf32>
    %81 = vector.multi_reduction <add>, %80, %cst_32 [2] : vector<2x8x8xf32> to vector<2x8xf32>
    %82 = vector.shape_cast %81 : vector<2x8xf32> to vector<2x8x1xf32>
    %83 = vector.broadcast %82 : vector<2x8x1xf32> to vector<2x8x8xf32>
    %84 = arith.divf %80, %83 : vector<2x8x8xf32>
    %85 = arith.truncf %84 : vector<2x8x8xf32> to vector<2x8x8xbf16>
    %86 = vector.extract_strided_slice %2 {offsets = [0, 0, 24], sizes = [2, 8, 8], strides = [1, 1, 1]} : vector<2x8x32xbf16> to vector<2x8x8xbf16>
    "tpu.trace_start"() <{level = 10 : i32, message = "bqk,bkd->bqd"}> : () -> ()
    %cst_33 = arith.constant dense<0.000000e+00> : vector<2x8x8xf32>
    %87 = tpu.matmul %85, %86, %cst_33 {dimension_numbers = #tpu.dot_dimension_numbers<[2], [1], [1], [2], [0, 0, 0, 1, 1, 2], [0], [0]>} : vector<2x8x8xbf16>, vector<2x8x8xbf16>, vector<2x8x8xf32> -> vector<2x8x8xf32>
    "tpu.trace_stop"() : () -> ()
    %88 = arith.truncf %87 : vector<2x8x8xf32> to vector<2x8x8xbf16>
    %c0_34 = arith.constant 0 : index
    %c0_35 = arith.constant 0 : index
    %c24 = arith.constant 24 : index
    %89 = vector.load %arg5[%c0_34, %c0_35, %c24] : memref<2x8x32xbf16, #tpu.memory_space<vmem>>, vector<2x8x8xbf16>
    tpu.vector_store %arg5[%c0_34, %c0_35, %c24], %88 {strides = array<i32>} : memref<2x8x32xbf16, #tpu.memory_space<vmem>>, vector<2x8x8xbf16>,
    return
  }
  func.func @transform_0(%arg0: i32, %arg1: i32) -> (i32, i32, i32) {
    %c0_i32 = arith.constant 0 : i32
    %c0_i32_0 = arith.constant 0 : i32
    return %arg0, %c0_i32, %arg1 : i32, i32, i32
  }
  func.func @transform_1(%arg0: i32, %arg1: i32) -> (i32, i32, i32) {
    %c0_i32 = arith.constant 0 : i32
    %c0_i32_0 = arith.constant 0 : i32
    return %arg0, %c0_i32, %arg1 : i32, i32, i32
  }
  func.func @transform_2(%arg0: i32, %arg1: i32) -> (i32, i32, i32) {
    %c0_i32 = arith.constant 0 : i32
    %c0_i32_0 = arith.constant 0 : i32
    return %arg0, %c0_i32, %arg1 : i32, i32, i32
  }
  func.func @transform_3(%arg0: i32, %arg1: i32) -> (i32, i32, i32) {
    %c0_i32 = arith.constant 0 : i32
    %c0_i32_0 = arith.constant 0 : i32
    return %arg0, %c0_i32, %arg1 : i32, i32, i32
  }
}

module attributes {stable_mosaic.version = 11 : i64} {
  func.func @kernel(%arg0: i32, %arg1: i32, %arg2: memref<16x32xbf16, #tpu.memory_space<vmem>>, %arg3: memref<32x32xbf16, #tpu.memory_space<vmem>>, %arg4: memref<1x32xf32, #tpu.memory_space<vmem>>, %arg5: memref<16x32xf32, #tpu.memory_space<vmem>>, %arg6: memref<16x32xf32, #tpu.memory_space<vmem>>) attributes {dimension_semantics = [#tpu.dimension_semantics<parallel>, #tpu.dimension_semantics<parallel>], iteration_bounds = array<i64: 1, 1>, scalar_prefetch = 0 : i64, scratch_operands = 0 : i64, tpu.core_type = #tpu.core_type<tc>, window_params = [{transform_indices = @transform_0, window_bounds = array<i64: 16, 32>}, {transform_indices = @transform_1, window_bounds = array<i64: 32, 32>}, {transform_indices = @transform_2, window_bounds = array<i64: 1, 32>}, {transform_indices = @transform_3, window_bounds = array<i64: 16, 32>}, {transform_indices = @transform_4, window_bounds = array<i64: 16, 32>}]} {
    %c0 = arith.constant 0 : index
    %c0_0 = arith.constant 0 : index
    %0 = vector.load %arg2[%c0, %c0_0] : memref<16x32xbf16, #tpu.memory_space<vmem>>, vector<16x32xbf16>
    %c0_1 = arith.constant 0 : index
    %c0_2 = arith.constant 0 : index
    %1 = vector.load %arg3[%c0_1, %c0_2] : memref<32x32xbf16, #tpu.memory_space<vmem>>, vector<32x32xbf16>
    %cst = arith.constant dense<0.000000e+00> : vector<16x32xf32>
    %2 = tpu.matmul %0, %1, %cst {dimension_numbers = #tpu.dot_dimension_numbers<[1], [0], [0], [1], [0, 0, 1, 1], [], []>} : vector<16x32xbf16>, vector<32x32xbf16>, vector<16x32xf32> -> vector<16x32xf32>
    %c0_3 = arith.constant 0 : index
    %c0_4 = arith.constant 0 : index
    %3 = vector.load %arg4[%c0_3, %c0_4] : memref<1x32xf32, #tpu.memory_space<vmem>>, vector<1x32xf32>
    %4 = vector.broadcast %3 : vector<1x32xf32> to vector<16x32xf32>
    %5 = arith.addf %2, %4 : vector<16x32xf32>
    %c0_5 = arith.constant 0 : index
    %c0_6 = arith.constant 0 : index
    %6 = vector.load %arg5[%c0_5, %c0_6] : memref<16x32xf32, #tpu.memory_space<vmem>>, vector<16x32xf32>
    %7 = arith.addf %5, %6 : vector<16x32xf32>
    %c0_7 = arith.constant 0 : index
    %c0_8 = arith.constant 0 : index
    %8 = vector.load %arg6[%c0_7, %c0_8] : memref<16x32xf32, #tpu.memory_space<vmem>>, vector<16x32xf32>
    tpu.vector_store %arg6[%c0_7, %c0_8], %7 {strides = array<i32>} : memref<16x32xf32, #tpu.memory_space<vmem>>, vector<16x32xf32>,
    return
  }
  func.func @transform_0(%arg0: i32, %arg1: i32) -> (i32, i32) {
    %c0_i32 = arith.constant 0 : i32
    %c0_i32_0 = arith.constant 0 : i32
    return %arg0, %c0_i32 : i32, i32
  }
  func.func @transform_1(%arg0: i32, %arg1: i32) -> (i32, i32) {
    %c0_i32 = arith.constant 0 : i32
    %c0_i32_0 = arith.constant 0 : i32
    return %c0_i32, %arg1 : i32, i32
  }
  func.func @transform_2(%arg0: i32, %arg1: i32) -> (i32, i32) {
    %c0_i32 = arith.constant 0 : i32
    %c0_i32_0 = arith.constant 0 : i32
    return %c0_i32, %arg1 : i32, i32
  }
  func.func @transform_3(%arg0: i32, %arg1: i32) -> (i32, i32) {
    %c0_i32 = arith.constant 0 : i32
    return %arg0, %arg1 : i32, i32
  }
  func.func @transform_4(%arg0: i32, %arg1: i32) -> (i32, i32) {
    %c0_i32 = arith.constant 0 : i32
    return %arg0, %arg1 : i32, i32
  }
}

module attributes {stable_mosaic.version = 11 : i64} {
  func.func @kernel(%arg0: i32, %arg1: i32, %arg2: memref<16x32xf32, #tpu.memory_space<vmem>>, %arg3: memref<32x128xbf16, #tpu.memory_space<vmem>>, %arg4: memref<1x128xf32, #tpu.memory_space<vmem>>, %arg5: memref<1x32xf32, #tpu.memory_space<vmem>>, %arg6: memref<1x32xf32, #tpu.memory_space<vmem>>, %arg7: memref<16x128xbf16, #tpu.memory_space<vmem>>) attributes {dimension_semantics = [#tpu.dimension_semantics<parallel>, #tpu.dimension_semantics<parallel>], iteration_bounds = array<i64: 1, 1>, scalar_prefetch = 0 : i64, scratch_operands = 0 : i64, tpu.core_type = #tpu.core_type<tc>, window_params = [{transform_indices = @transform_0, window_bounds = array<i64: 16, 32>}, {transform_indices = @transform_1, window_bounds = array<i64: 32, 128>}, {transform_indices = @transform_2, window_bounds = array<i64: 1, 128>}, {pipeline_mode = #tpu.pipeline_mode<synchronous>, transform_indices = @transform_3, window_bounds = array<i64: 1, 32>}, {pipeline_mode = #tpu.pipeline_mode<synchronous>, transform_indices = @transform_4, window_bounds = array<i64: 1, 32>}, {transform_indices = @transform_5, window_bounds = array<i64: 16, 128>}]} {
    %c0 = arith.constant 0 : index
    %c0_0 = arith.constant 0 : index
    %0 = vector.load %arg2[%c0, %c0_0] : memref<16x32xf32, #tpu.memory_space<vmem>>, vector<16x32xf32>
    %cst = arith.constant dense<0.000000e+00> : vector<16xf32>
    %1 = vector.multi_reduction <add>, %0, %cst [1] : vector<16x32xf32> to vector<16xf32>
    %2 = vector.shape_cast %1 : vector<16xf32> to vector<16x1xf32>
    %cst_1 = arith.constant 3.200000e+01 : f32
    %3 = vector.broadcast %cst_1 : f32 to vector<16x1xf32>
    %4 = arith.divf %2, %3 : vector<16x1xf32>
    %5 = vector.broadcast %4 : vector<16x1xf32> to vector<16x32xf32>
    %6 = arith.subf %0, %5 : vector<16x32xf32>
    %7 = arith.mulf %6, %6 : vector<16x32xf32>
    %cst_2 = arith.constant dense<0.000000e+00> : vector<16xf32>
    %8 = vector.multi_reduction <add>, %7, %cst_2 [1] : vector<16x32xf32> to vector<16xf32>
    %9 = vector.shape_cast %8 : vector<16xf32> to vector<16x1xf32>
    %cst_3 = arith.constant 3.200000e+01 : f32
    %10 = vector.broadcast %cst_3 : f32 to vector<16x1xf32>
    %11 = arith.divf %9, %10 : vector<16x1xf32>
    %12 = vector.broadcast %4 : vector<16x1xf32> to vector<16x32xf32>
    %13 = arith.subf %0, %12 : vector<16x32xf32>
    %cst_4 = arith.constant 9.99999974E-6 : f32
    %14 = vector.broadcast %cst_4 : f32 to vector<16x1xf32>
    %15 = arith.addf %11, %14 : vector<16x1xf32>
    %16 = math.rsqrt %15 : vector<16x1xf32>
    %17 = vector.broadcast %16 : vector<16x1xf32> to vector<16x32xf32>
    %18 = arith.mulf %13, %17 : vector<16x32xf32>
    %c0_5 = arith.constant 0 : index
    %c0_6 = arith.constant 0 : index
    %19 = vector.load %arg5[%c0_5, %c0_6] : memref<1x32xf32, #tpu.memory_space<vmem>>, vector<1x32xf32>
    %20 = vector.broadcast %19 : vector<1x32xf32> to vector<16x32xf32>
    %21 = arith.mulf %18, %20 : vector<16x32xf32>
    %c0_7 = arith.constant 0 : index
    %c0_8 = arith.constant 0 : index
    %22 = vector.load %arg6[%c0_7, %c0_8] : memref<1x32xf32, #tpu.memory_space<vmem>>, vector<1x32xf32>
    %23 = vector.broadcast %22 : vector<1x32xf32> to vector<16x32xf32>
    %24 = arith.addf %21, %23 : vector<16x32xf32>
    %25 = arith.truncf %24 : vector<16x32xf32> to vector<16x32xbf16>
    %c0_9 = arith.constant 0 : index
    %c0_10 = arith.constant 0 : index
    %26 = vector.load %arg3[%c0_9, %c0_10] : memref<32x128xbf16, #tpu.memory_space<vmem>>, vector<32x128xbf16>
    %cst_11 = arith.constant dense<0.000000e+00> : vector<16x128xf32>
    %27 = tpu.matmul %25, %26, %cst_11 {dimension_numbers = #tpu.dot_dimension_numbers<[1], [0], [0], [1], [0, 0, 1, 1], [], []>} : vector<16x32xbf16>, vector<32x128xbf16>, vector<16x128xf32> -> vector<16x128xf32>
    %c0_12 = arith.constant 0 : index
    %c0_13 = arith.constant 0 : index
    %28 = vector.load %arg4[%c0_12, %c0_13] : memref<1x128xf32, #tpu.memory_space<vmem>>, vector<1x128xf32>
    %29 = vector.broadcast %28 : vector<1x128xf32> to vector<16x128xf32>
    %30 = arith.addf %27, %29 : vector<16x128xf32>
    %cst_14 = arith.constant 1.702000e+00 : f32
    %31 = vector.broadcast %cst_14 : f32 to vector<16x128xf32>
    %32 = arith.mulf %31, %30 : vector<16x128xf32>
    %33 = arith.negf %32 : vector<16x128xf32>
    %34 = math.exp %33 : vector<16x128xf32>
    %cst_15 = arith.constant 1.000000e+00 : f32
    %35 = vector.broadcast %cst_15 : f32 to vector<16x128xf32>
    %36 = arith.addf %35, %34 : vector<16x128xf32>
    %37 = arith.divf %35, %36 : vector<16x128xf32>
    %38 = arith.mulf %30, %37 : vector<16x128xf32>
    %39 = arith.truncf %38 : vector<16x128xf32> to vector<16x128xbf16>
    %c0_16 = arith.constant 0 : index
    %c0_17 = arith.constant 0 : index
    %40 = vector.load %arg7[%c0_16, %c0_17] : memref<16x128xbf16, #tpu.memory_space<vmem>>, vector<16x128xbf16>
    tpu.vector_store %arg7[%c0_16, %c0_17], %39 {strides = array<i32>} : memref<16x128xbf16, #tpu.memory_space<vmem>>, vector<16x128xbf16>,
    return
  }
  func.func @transform_0(%arg0: i32, %arg1: i32) -> (i32, i32) {
    %c0_i32 = arith.constant 0 : i32
    %c0_i32_0 = arith.constant 0 : i32
    return %arg0, %c0_i32 : i32, i32
  }
  func.func @transform_1(%arg0: i32, %arg1: i32) -> (i32, i32) {
    %c0_i32 = arith.constant 0 : i32
    %c0_i32_0 = arith.constant 0 : i32
    return %c0_i32, %arg1 : i32, i32
  }
  func.func @transform_2(%arg0: i32, %arg1: i32) -> (i32, i32) {
    %c0_i32 = arith.constant 0 : i32
    %c0_i32_0 = arith.constant 0 : i32
    return %c0_i32, %arg1 : i32, i32
  }
  func.func @transform_3(%arg0: i32, %arg1: i32) -> (i32, i32) {
    %c0_i32 = arith.constant 0 : i32
    %c0_i32_0 = arith.constant 0 : i32
    %c0_i32_1 = arith.constant 0 : i32
    return %c0_i32, %c0_i32_0 : i32, i32
  }
  func.func @transform_4(%arg0: i32, %arg1: i32) -> (i32, i32) {
    %c0_i32 = arith.constant 0 : i32
    %c0_i32_0 = arith.constant 0 : i32
    %c0_i32_1 = arith.constant 0 : i32
    return %c0_i32, %c0_i32_0 : i32, i32
  }
  func.func @transform_5(%arg0: i32, %arg1: i32) -> (i32, i32) {
    %c0_i32 = arith.constant 0 : i32
    return %arg0, %arg1 : i32, i32
  }
}

module attributes {stable_mosaic.version = 11 : i64} {
  func.func @kernel(%arg0: i32, %arg1: i32, %arg2: memref<16x128xbf16, #tpu.memory_space<vmem>>, %arg3: memref<128x32xbf16, #tpu.memory_space<vmem>>, %arg4: memref<1x32xf32, #tpu.memory_space<vmem>>, %arg5: memref<16x32xf32, #tpu.memory_space<vmem>>, %arg6: memref<16x32xf32, #tpu.memory_space<vmem>>) attributes {dimension_semantics = [#tpu.dimension_semantics<parallel>, #tpu.dimension_semantics<parallel>], iteration_bounds = array<i64: 1, 1>, scalar_prefetch = 0 : i64, scratch_operands = 0 : i64, tpu.core_type = #tpu.core_type<tc>, window_params = [{transform_indices = @transform_0, window_bounds = array<i64: 16, 128>}, {transform_indices = @transform_1, window_bounds = array<i64: 128, 32>}, {transform_indices = @transform_2, window_bounds = array<i64: 1, 32>}, {transform_indices = @transform_3, window_bounds = array<i64: 16, 32>}, {transform_indices = @transform_4, window_bounds = array<i64: 16, 32>}]} {
    %c0 = arith.constant 0 : index
    %c0_0 = arith.constant 0 : index
    %0 = vector.load %arg2[%c0, %c0_0] : memref<16x128xbf16, #tpu.memory_space<vmem>>, vector<16x128xbf16>
    %c0_1 = arith.constant 0 : index
    %c0_2 = arith.constant 0 : index
    %1 = vector.load %arg3[%c0_1, %c0_2] : memref<128x32xbf16, #tpu.memory_space<vmem>>, vector<128x32xbf16>
    %cst = arith.constant dense<0.000000e+00> : vector<16x32xf32>
    %2 = tpu.matmul %0, %1, %cst {dimension_numbers = #tpu.dot_dimension_numbers<[1], [0], [0], [1], [0, 0, 1, 1], [], []>} : vector<16x128xbf16>, vector<128x32xbf16>, vector<16x32xf32> -> vector<16x32xf32>
    %c0_3 = arith.constant 0 : index
    %c0_4 = arith.constant 0 : index
    %3 = vector.load %arg4[%c0_3, %c0_4] : memref<1x32xf32, #tpu.memory_space<vmem>>, vector<1x32xf32>
    %4 = vector.broadcast %3 : vector<1x32xf32> to vector<16x32xf32>
    %5 = arith.addf %2, %4 : vector<16x32xf32>
    %c0_5 = arith.constant 0 : index
    %c0_6 = arith.constant 0 : index
    %6 = vector.load %arg5[%c0_5, %c0_6] : memref<16x32xf32, #tpu.memory_space<vmem>>, vector<16x32xf32>
    %7 = arith.addf %5, %6 : vector<16x32xf32>
    %c0_7 = arith.constant 0 : index
    %c0_8 = arith.constant 0 : index
    %8 = vector.load %arg6[%c0_7, %c0_8] : memref<16x32xf32, #tpu.memory_space<vmem>>, vector<16x32xf32>
    tpu.vector_store %arg6[%c0_7, %c0_8], %7 {strides = array<i32>} : memref<16x32xf32, #tpu.memory_space<vmem>>, vector<16x32xf32>,
    return
  }
  func.func @transform_0(%arg0: i32, %arg1: i32) -> (i32, i32) {
    %c0_i32 = arith.constant 0 : i32
    %c0_i32_0 = arith.constant 0 : i32
    return %arg0, %c0_i32 : i32, i32
  }
  func.func @transform_1(%arg0: i32, %arg1: i32) -> (i32, i32) {
    %c0_i32 = arith.constant 0 : i32
    %c0_i32_0 = arith.constant 0 : i32
    return %c0_i32, %arg1 : i32, i32
  }
  func.func @transform_2(%arg0: i32, %arg1: i32) -> (i32, i32) {
    %c0_i32 = arith.constant 0 : i32
    %c0_i32_0 = arith.constant 0 : i32
    return %c0_i32, %arg1 : i32, i32
  }
  func.func @transform_3(%arg0: i32, %arg1: i32) -> (i32, i32) {
    %c0_i32 = arith.constant 0 : i32
    return %arg0, %arg1 : i32, i32
  }
  func.func @transform_4(%arg0: i32, %arg1: i32) -> (i32, i32) {
    %c0_i32 = arith.constant 0 : i32
    return %arg0, %arg1 : i32, i32
  }
}

module attributes {stable_mosaic.version = 11 : i64} {
  func.func @kernel(%arg0: i32, %arg1: i32, %arg2: memref<2x32xf32, #tpu.memory_space<vmem>>, %arg3: memref<32x16xbf16, #tpu.memory_space<vmem>>, %arg4: memref<1x32xf32, #tpu.memory_space<vmem>>, %arg5: memref<1x32xf32, #tpu.memory_space<vmem>>, %arg6: memref<2x16xf32, #tpu.memory_space<vmem>>) attributes {dimension_semantics = [#tpu.dimension_semantics<parallel>, #tpu.dimension_semantics<parallel>], iteration_bounds = array<i64: 1, 1>, scalar_prefetch = 0 : i64, scratch_operands = 0 : i64, tpu.core_type = #tpu.core_type<tc>, window_params = [{transform_indices = @transform_0, window_bounds = array<i64: 2, 32>}, {transform_indices = @transform_1, window_bounds = array<i64: 32, 16>}, {pipeline_mode = #tpu.pipeline_mode<synchronous>, transform_indices = @transform_2, window_bounds = array<i64: 1, 32>}, {pipeline_mode = #tpu.pipeline_mode<synchronous>, transform_indices = @transform_3, window_bounds = array<i64: 1, 32>}, {transform_indices = @transform_4, window_bounds = array<i64: 2, 16>}]} {
    %c0 = arith.constant 0 : index
    %c0_0 = arith.constant 0 : index
    %0 = vector.load %arg2[%c0, %c0_0] : memref<2x32xf32, #tpu.memory_space<vmem>>, vector<2x32xf32>
    %cst = arith.constant dense<0.000000e+00> : vector<2xf32>
    %1 = vector.multi_reduction <add>, %0, %cst [1] : vector<2x32xf32> to vector<2xf32>
    %2 = vector.shape_cast %1 : vector<2xf32> to vector<2x1xf32>
    %cst_1 = arith.constant 3.200000e+01 : f32
    %3 = vector.broadcast %cst_1 : f32 to vector<2x1xf32>
    %4 = arith.divf %2, %3 : vector<2x1xf32>
    %5 = vector.broadcast %4 : vector<2x1xf32> to vector<2x32xf32>
    %6 = arith.subf %0, %5 : vector<2x32xf32>
    %7 = arith.mulf %6, %6 : vector<2x32xf32>
    %cst_2 = arith.constant dense<0.000000e+00> : vector<2xf32>
    %8 = vector.multi_reduction <add>, %7, %cst_2 [1] : vector<2x32xf32> to vector<2xf32>
    %9 = vector.shape_cast %8 : vector<2xf32> to vector<2x1xf32>
    %cst_3 = arith.constant 3.200000e+01 : f32
    %10 = vector.broadcast %cst_3 : f32 to vector<2x1xf32>
    %11 = arith.divf %9, %10 : vector<2x1xf32>
    %12 = vector.broadcast %4 : vector<2x1xf32> to vector<2x32xf32>
    %13 = arith.subf %0, %12 : vector<2x32xf32>
    %cst_4 = arith.constant 9.99999974E-6 : f32
    %14 = vector.broadcast %cst_4 : f32 to vector<2x1xf32>
    %15 = arith.addf %11, %14 : vector<2x1xf32>
    %16 = math.rsqrt %15 : vector<2x1xf32>
    %17 = vector.broadcast %16 : vector<2x1xf32> to vector<2x32xf32>
    %18 = arith.mulf %13, %17 : vector<2x32xf32>
    %c0_5 = arith.constant 0 : index
    %c0_6 = arith.constant 0 : index
    %19 = vector.load %arg4[%c0_5, %c0_6] : memref<1x32xf32, #tpu.memory_space<vmem>>, vector<1x32xf32>
    %20 = vector.broadcast %19 : vector<1x32xf32> to vector<2x32xf32>
    %21 = arith.mulf %18, %20 : vector<2x32xf32>
    %c0_7 = arith.constant 0 : index
    %c0_8 = arith.constant 0 : index
    %22 = vector.load %arg5[%c0_7, %c0_8] : memref<1x32xf32, #tpu.memory_space<vmem>>, vector<1x32xf32>
    %23 = vector.broadcast %22 : vector<1x32xf32> to vector<2x32xf32>
    %24 = arith.addf %21, %23 : vector<2x32xf32>
    %25 = arith.truncf %24 : vector<2x32xf32> to vector<2x32xbf16>
    %c0_9 = arith.constant 0 : index
    %c0_10 = arith.constant 0 : index
    %26 = vector.load %arg3[%c0_9, %c0_10] : memref<32x16xbf16, #tpu.memory_space<vmem>>, vector<32x16xbf16>
    %cst_11 = arith.constant dense<0.000000e+00> : vector<2x16xf32>
    %27 = tpu.matmul %25, %26, %cst_11 {dimension_numbers = #tpu.dot_dimension_numbers<[1], [0], [0], [1], [0, 0, 1, 1], [], []>} : vector<2x32xbf16>, vector<32x16xbf16>, vector<2x16xf32> -> vector<2x16xf32>
    %c0_12 = arith.constant 0 : index
    %c0_13 = arith.constant 0 : index
    %28 = vector.load %arg6[%c0_12, %c0_13] : memref<2x16xf32, #tpu.memory_space<vmem>>, vector<2x16xf32>
    tpu.vector_store %arg6[%c0_12, %c0_13], %27 {strides = array<i32>} : memref<2x16xf32, #tpu.memory_space<vmem>>, vector<2x16xf32>,
    return
  }
  func.func @transform_0(%arg0: i32, %arg1: i32) -> (i32, i32) {
    %c0_i32 = arith.constant 0 : i32
    %c0_i32_0 = arith.constant 0 : i32
    return %arg0, %c0_i32 : i32, i32
  }
  func.func @transform_1(%arg0: i32, %arg1: i32) -> (i32, i32) {
    %c0_i32 = arith.constant 0 : i32
    %c0_i32_0 = arith.constant 0 : i32
    return %c0_i32, %arg1 : i32, i32
  }
  func.func @transform_2(%arg0: i32, %arg1: i32) -> (i32, i32) {
    %c0_i32 = arith.constant 0 : i32
    %c0_i32_0 = arith.constant 0 : i32
    %c0_i32_1 = arith.constant 0 : i32
    return %c0_i32, %c0_i32_0 : i32, i32
  }
  func.func @transform_3(%arg0: i32, %arg1: i32) -> (i32, i32) {
    %c0_i32 = arith.constant 0 : i32
    %c0_i32_0 = arith.constant 0 : i32
    %c0_i32_1 = arith.constant 0 : i32
    return %c0_i32, %c0_i32_0 : i32, i32
  }
  func.func @transform_4(%arg0: i32, %arg1: i32) -> (i32, i32) {
    %c0_i32 = arith.constant 0 : i32
    return %arg0, %arg1 : i32, i32
  }
}

</mosaic_0001>

<llo_original>
// kernel: encode_image.14
$region0: #{encode_image.14}
  #allocation0 [shape = 'u32[]', space=smem, size = 0x4, offset = 0x4, fixed_abs, tag = 'smem constant byte address 0x4 - core index']
  #allocation1 [shape = 'u32[144,128]{1,0:T(1,128)}', space=vmem, size = 0x12000, scoped, tag = 'internal scratch']
  %s0 = inlined_call_operand.vmem [shape: f32[16,32], index: 0, kind: input, shape index: {}]
  %s1 = inlined_call_operand.vmem [shape: f32[1,32], index: 1, kind: input, shape index: {}]
  %s2 = inlined_call_operand.vmem [shape: f32[1,32], index: 2, kind: input, shape index: {}]
  %s3 = inlined_call_operand.vmem [shape: f32[16,32], index: 3, kind: output, shape index: {}]
  %s4 = sld [smem:[#allocation0]]
  $region22: #{encode_image.14} parent=0
    _
  %s6 = ssub.s32 1, %s4
  %s7 = scalar_select 0, %s6, %s4
  // Predicated region
  $region2: #{encode_image.14} parent=0 // pred_check
    _
  $region3: #{encode_image.14} parent=0 // pred_check_branch
    %9 = sbr.rel (0) target = $region5
  $region4: #{encode_image.14} parent=0 // pred_region
    _
  $region5: #{encode_image.14} parent=0 // pred_fallthru
    _
  // Predicated region
  $region6: #{encode_image.14} parent=0 // pred_check
    _
  $region7: #{encode_image.14} parent=0 // pred_check_branch
    %11 = sbr.rel (0) target = $region9
  $region8: #{encode_image.14} parent=0 // pred_region
    _
  $region9: #{encode_image.14} parent=0 // pred_fallthru
    _
  // Predicated region
  $region10: #{encode_image.14} parent=0 // pred_check
    _
  $region11: #{encode_image.14} parent=0 // pred_check_branch
    %13 = sbr.rel (0) target = $region13
  $region12: #{encode_image.14} parent=0 // pred_region
    _
  $region13: #{encode_image.14} parent=0 // pred_fallthru
    _
  %v14 = vld [vmem:[%s0] sm:$0xff]
  %v15 = vld [vmem:[%s0 + $0x8] sm:$0xff]
  %vm16 = vcmask 261120
  %v17 = vsel %vm16, %v14, 0.0
  %18 = vadd.xlane.f32.xlu0 %v17
  %v19 = vpop.xlane.xlu0 %18
  %v20 = vsel %vm16, %v15, 0.0
  %21 = vadd.xlane.f32.xlu0 %v20
  %v22 = vpop.xlane.xlu0 %21
  %v23 = vrcp.pop 32.0
  %v24 = vmul.f32 %v19, %v23
  %v25 = vmul.f32 %v22, %v23
  %v26 = vsub.f32 %v14, %v24
  %v27 = vsub.f32 %v15, %v25
  %v28 = vmul.f32 %v26, %v26
  %v29 = vmul.f32 %v27, %v27
  %v30 = vsel %vm16, %v28, 0.0
  %31 = vadd.xlane.f32.xlu0 %v30
  %v32 = vpop.xlane.xlu0 %31
  %v33 = vsel %vm16, %v29, 0.0
  %34 = vadd.xlane.f32.xlu0 %v33
  %v35 = vpop.xlane.xlu0 %34
  %v36 = vmul.f32 %v32, %v23
  %v37 = vmul.f32 %v35, %v23
  %v38 = vadd.f32 %v36, 1e-05
  %v39 = vadd.f32 %v37, 1e-05
  %v40 = vrsqrt.pop %v38
  %v41 = vrsqrt.pop %v39
  %v42 = vmul.f32 %v26, %v40
  %v43 = vmul.f32 %v27, %v41
  %v44 = vld [vmem:[%s1] sm:$0x1]
  %v46 = vlaneseq
  %v47 = vshrl.u32 %v46, 7
  %v48 = vsub.s32 0, %v47
  %v49 = vrot.slane %v44, %v48
  %v51 = vmul.f32 %v42, %v49
  %v52 = vmul.f32 %v43, %v49
  %v53 = vld [vmem:[%s2] sm:$0x1]
  %v55 = vlaneseq
  %v56 = vshrl.u32 %v55, 7
  %v57 = vsub.s32 0, %v56
  %v58 = vrot.slane %v53, %v57
  %v60 = vadd.f32 %v51, %v58
  %v61 = vadd.f32 %v52, %v58
  %62 = vst.msk [vmem:[%s3] sm:$0xff] %vm16, %v60
  %63 = vst.msk [vmem:[%s3 + $0x8] sm:$0xff] %vm16, %v61
  // Predicated region
  $region14: #{encode_image.14} parent=0 // pred_check
    _
  $region15: #{encode_image.14} parent=0 // pred_check_branch
    %65 = sbr.rel (0) target = $region17
  $region16: #{encode_image.14} parent=0 // pred_region
    _
  $region17: #{encode_image.14} parent=0 // pred_fallthru
    _
  // Predicated region
  $region18: #{encode_image.14} parent=0 // pred_check
    _
  $region19: #{encode_image.14} parent=0 // pred_check_branch
    %67 = sbr.rel (0) target = $region21
  $region20: #{encode_image.14} parent=0 // pred_region
    _
  $region21: #{encode_image.14} parent=0 // pred_fallthru
    _

// kernel: encode_image.15
$region0: #{encode_image.15}
  #allocation0 [shape = 'u32[]', space=smem, size = 0x4, offset = 0x4, fixed_abs, tag = 'smem constant byte address 0x4 - core index']
  #allocation1 [shape = 'u32[144,128]{1,0:T(1,128)}', space=vmem, size = 0x12000, scoped, tag = 'internal scratch']
  %s0 = inlined_call_operand.vmem [shape: f32[16,32], index: 0, kind: input, shape index: {}]
  %s1 = inlined_call_operand.vmem [shape: bf16[32,96], index: 1, kind: input, shape index: {}]
  %s2 = inlined_call_operand.vmem [shape: f32[1,96], index: 2, kind: input, shape index: {}]
  %s3 = inlined_call_operand.vmem [shape: f32[1,32], index: 3, kind: input, shape index: {}]
  %s4 = inlined_call_operand.vmem [shape: f32[1,32], index: 4, kind: input, shape index: {}]
  %s5 = inlined_call_operand.vmem [shape: bf16[16,96], index: 5, kind: output, shape index: {}]
  %s6 = sld [smem:[#allocation0]]
  $region30: #{encode_image.15} parent=0
    _
  %s8 = ssub.s32 1, %s6
  %s9 = scalar_select 0, %s8, %s6
  // Predicated region
  $region2: #{encode_image.15} parent=0 // pred_check
    _
  $region3: #{encode_image.15} parent=0 // pred_check_branch
    %11 = sbr.rel (0) target = $region5
  $region4: #{encode_image.15} parent=0 // pred_region
    _
  $region5: #{encode_image.15} parent=0 // pred_fallthru
    _
  // Predicated region
  $region6: #{encode_image.15} parent=0 // pred_check
    _
  $region7: #{encode_image.15} parent=0 // pred_check_branch
    %13 = sbr.rel (0) target = $region9
  $region8: #{encode_image.15} parent=0 // pred_region
    _
  $region9: #{encode_image.15} parent=0 // pred_fallthru
    _
  // Predicated region
  $region10: #{encode_image.15} parent=0 // pred_check
    _
  $region11: #{encode_image.15} parent=0 // pred_check_branch
    %15 = sbr.rel (0) target = $region13
  $region12: #{encode_image.15} parent=0 // pred_region
    _
  $region13: #{encode_image.15} parent=0 // pred_fallthru
    _
  // Predicated region
  $region14: #{encode_image.15} parent=0 // pred_check
    _
  $region15: #{encode_image.15} parent=0 // pred_check_branch
    %17 = sbr.rel (0) target = $region17
  $region16: #{encode_image.15} parent=0 // pred_region
    _
  $region17: #{encode_image.15} parent=0 // pred_fallthru
    _
  // Predicated region
  $region18: #{encode_image.15} parent=0 // pred_check
    _
  $region19: #{encode_image.15} parent=0 // pred_check_branch
    %19 = sbr.rel (0) target = $region21
  $region20: #{encode_image.15} parent=0 // pred_region
    _
  $region21: #{encode_image.15} parent=0 // pred_fallthru
    _
  %v21 = vld [vmem:[%s0] sm:$0xff]
  %v22 = vld [vmem:[%s0 + $0x8] sm:$0xff]
  %vm23 = vcmask 261120
  %v24 = vsel %vm23, %v21, 0.0
  %25 = vadd.xlane.f32.xlu0 %v24
  %v26 = vpop.xlane.xlu0 %25
  %v27 = vsel %vm23, %v22, 0.0
  %28 = vadd.xlane.f32.xlu0 %v27
  %v29 = vpop.xlane.xlu0 %28
  %v30 = vrcp.pop 32.0
  %v31 = vmul.f32 %v26, %v30
  %v32 = vmul.f32 %v29, %v30
  %v33 = vsub.f32 %v21, %v31
  %v34 = vsub.f32 %v22, %v32
  %v35 = vmul.f32 %v33, %v33
  %v36 = vmul.f32 %v34, %v34
  %v37 = vsel %vm23, %v35, 0.0
  %38 = vadd.xlane.f32.xlu0 %v37
  %v39 = vpop.xlane.xlu0 %38
  %v40 = vsel %vm23, %v36, 0.0
  %41 = vadd.xlane.f32.xlu0 %v40
  %v42 = vpop.xlane.xlu0 %41
  %v43 = vmul.f32 %v39, %v30
  %v44 = vmul.f32 %v42, %v30
  %v45 = vadd.f32 %v43, 1e-05
  %v46 = vadd.f32 %v44, 1e-05
  %v47 = vrsqrt.pop %v45
  %v48 = vrsqrt.pop %v46
  %v49 = vmul.f32 %v33, %v47
  %v50 = vmul.f32 %v34, %v48
  %v51 = vld [vmem:[%s3] sm:$0x1]
  %v53 = vlaneseq
  %v54 = vshrl.u32 %v53, 7
  %v55 = vsub.s32 0, %v54
  %v56 = vrot.slane %v51, %v55
  %v58 = vmul.f32 %v49, %v56
  %v59 = vmul.f32 %v50, %v56
  %v60 = vld [vmem:[%s4] sm:$0x1]
  %v62 = vlaneseq
  %v63 = vshrl.u32 %v62, 7
  %v64 = vsub.s32 0, %v63
  %v65 = vrot.slane %v60, %v64
  %v67 = vadd.f32 %v58, %v65
  %v68 = vadd.f32 %v59, %v65
  %v69 = vpack.c.bf16 %v68, %v67
  %v70 = vld [vmem:[%s1] sm:$0xf]
  %v71 = vld [vmem:[%s1 + $0x4] sm:$0xf]
  %v72 = vld [vmem:[%s1 + $0x8] sm:$0xf]
  %v73 = vld [vmem:[%s1 + $0xc] sm:$0xf]
  %v74 = vld [vmem:[%s2] sm:$0x1]
  %v76 = vlaneseq
  %v77 = vshrl.u32 %v76, 7
  %v78 = vsub.s32 0, %v77
  %v79 = vrot.slane %v74, %v78
  %v85 = vunpack.c.l.b16 %v70
  %v86 = vunpack.c.l.b16 %v71
  %v87 = vunpack.c.l.b16 %v72
  %v88 = vunpack.c.l.b16 %v73
  %v89 = vpack.c.b16 %v86, %v85
  %v90 = vpack.c.b16 %v88, %v87
  %v94 = vsel %vm23, %v69, 0
  %96 = vmatprep.subr.bf16.mxu0 0
  %97 = vmatpush1.bf16.msra.mxu0 %v89
  %98 = vmatprep.subr.bf16.mxu0 0
  %99 = vmatpush1.bf16.msra.mxu0 %v90
  %100 = vmatprep.subr.bf16.mxu0 0
  %101 = vmatpush1.bf16.msra.mxu0 0
  %102 = vmatprep.subr.bf16.mxu0 0
  %103 = vmatpush1.bf16.msra.mxu0 0
  %104 = vmatprep.subr.bf16.mxu0 0
  %105 = vmatpush1.bf16.msra.mxu0 0
  %106 = vmatprep.subr.bf16.mxu0 0
  %107 = vmatpush1.bf16.msra.mxu0 0
  %108 = vmatprep.subr.bf16.mxu0 0
  %109 = vmatpush1.bf16.msra.mxu0 0
  %110 = vmatprep.subr.bf16.mxu0 0
  %111 = vmatpush1.bf16.msra.mxu0 0
  %112 = vmatprep.subr.bf16.mxu0 0
  %113 = vmatpush1.bf16.msra.mxu0 0
  %114 = vmatprep.subr.bf16.mxu0 0
  %115 = vmatpush1.bf16.msra.mxu0 0
  %116 = vmatprep.subr.bf16.mxu0 0
  %117 = vmatpush1.bf16.msra.mxu0 0
  %118 = vmatprep.subr.bf16.mxu0 0
  %119 = vmatpush1.bf16.msra.mxu0 0
  %120 = vmatprep.subr.bf16.mxu0 0
  %121 = vmatpush1.bf16.msra.mxu0 0
  %122 = vmatprep.subr.bf16.mxu0 0
  %123 = vmatpush1.bf16.msra.mxu0 0
  %124 = vmatprep.subr.bf16.mxu0 0
  %125 = vmatpush1.bf16.msra.mxu0 0
  %126 = vmatprep.subr.bf16.mxu0 0
  %127 = vmatpush1.bf16.msra.mxu0 0
  %128 = vmatprep.mubr.bf16.mxu0 0
  %129 = vmatmul.mubr.bf16.gmra.mrb[0].mxu0 %v94
  %v130 = vpop.f32.mrb[0].mxu0
  %v131 = vadd.f32 %v79, %v130
  %v132 = vpop.f32.mrb[0].mxu0
  %v133 = vpop.f32.mrb[0].mxu0
  %v134 = vadd.f32 %v79, %v133
  %v135 = vpop.f32.mrb[0].mxu0
  %136 = vdwg.mxu0
  %v137 = vpack.c.bf16 %v134, %v131
  %v139 = vunpack.c.l.b16 %v137
  %v140 = vunpack.c.h.b16 %v137
  %v141 = vpack.c.b16 %v139, %v139
  %v142 = vpack.c.b16 %v140, %v140
  %vm145 = vcmask 781312
  %146 = vst.msk [vmem:[%s5] sm:$0xf] %vm145, %v141
  %147 = vst.msk [vmem:[%s5 + $0x4] sm:$0xf] %vm145, %v142
  // Predicated region
  $region22: #{encode_image.15} parent=0 // pred_check
    _
  $region23: #{encode_image.15} parent=0 // pred_check_branch
    %149 = sbr.rel (0) target = $region25
  $region24: #{encode_image.15} parent=0 // pred_region
    _
  $region25: #{encode_image.15} parent=0 // pred_fallthru
    _
  // Predicated region
  $region26: #{encode_image.15} parent=0 // pred_check
    _
  $region27: #{encode_image.15} parent=0 // pred_check_branch
    %151 = sbr.rel (0) target = $region29
  $region28: #{encode_image.15} parent=0 // pred_region
    _
  $region29: #{encode_image.15} parent=0 // pred_fallthru
    _

// kernel: encode_image.13
$region0: #{encode_image.13}
  #allocation0 [shape = 'u32[]', space=smem, size = 0x4, offset = 0x4, fixed_abs, tag = 'smem constant byte address 0x4 - core index']
  #allocation1 [shape = 'u32[144,128]{1,0:T(1,128)}', space=vmem, size = 0x12000, scoped, tag = 'internal scratch']
  %s0 = inlined_call_operand.vmem [shape: f32[8,192], index: 0, kind: input, shape index: {}]
  %s1 = inlined_call_operand.vmem [shape: bf16[192,32], index: 1, kind: input, shape index: {}]
  %s2 = inlined_call_operand.vmem [shape: f32[8,32], index: 2, kind: output, shape index: {}]
  %s3 = sld [smem:[#allocation0]]
  $region18: #{encode_image.13} parent=0
    _
  %s5 = ssub.s32 1, %s3
  %s6 = scalar_select 0, %s5, %s3
  // Predicated region
  $region2: #{encode_image.13} parent=0 // pred_check
    _
  $region3: #{encode_image.13} parent=0 // pred_check_branch
    %8 = sbr.rel (0) target = $region5
  $region4: #{encode_image.13} parent=0 // pred_region
    _
  $region5: #{encode_image.13} parent=0 // pred_fallthru
    _
  // Predicated region
  $region6: #{encode_image.13} parent=0 // pred_check
    _
  $region7: #{encode_image.13} parent=0 // pred_check_branch
    %10 = sbr.rel (0) target = $region9
  $region8: #{encode_image.13} parent=0 // pred_region
    _
  $region9: #{encode_image.13} parent=0 // pred_fallthru
    _
  %v12 = vld [vmem:[%s0] sm:$0xff]
  %v13 = vld [vmem:[%s0 + $0x8] sm:$0xff]
  %v14 = vpack.c.bf16 %v12, %v12
  %v15 = vpack.c.bf16 %v13, %v13
  %v16 = vld [vmem:[%s1] sm:$0xf]
  %v17 = vld [vmem:[%s1 + $0x4] sm:$0xf]
  %v18 = vld [vmem:[%s1 + $0x8] sm:$0xf]
  %v19 = vld [vmem:[%s1 + $0xc] sm:$0xf]
  %v20 = vld [vmem:[%s1 + $0x10] sm:$0xf]
  %v21 = vld [vmem:[%s1 + $0x14] sm:$0xf]
  %v22 = vld [vmem:[%s1 + $0x18] sm:$0xf]
  %v23 = vld [vmem:[%s1 + $0x1c] sm:$0xf]
  %v24 = vld [vmem:[%s1 + $0x20] sm:$0xf]
  %v25 = vld [vmem:[%s1 + $0x24] sm:$0xf]
  %v26 = vld [vmem:[%s1 + $0x28] sm:$0xf]
  %v27 = vld [vmem:[%s1 + $0x2c] sm:$0xf]
  %v28 = vld [vmem:[%s1 + $0x30] sm:$0xf]
  %v29 = vld [vmem:[%s1 + $0x34] sm:$0xf]
  %v30 = vld [vmem:[%s1 + $0x38] sm:$0xf]
  %v31 = vld [vmem:[%s1 + $0x3c] sm:$0xf]
  %v32 = vld [vmem:[%s1 + $0x40] sm:$0xf]
  %v33 = vld [vmem:[%s1 + $0x44] sm:$0xf]
  %v34 = vld [vmem:[%s1 + $0x48] sm:$0xf]
  %v35 = vld [vmem:[%s1 + $0x4c] sm:$0xf]
  %v36 = vld [vmem:[%s1 + $0x50] sm:$0xf]
  %v37 = vld [vmem:[%s1 + $0x54] sm:$0xf]
  %v38 = vld [vmem:[%s1 + $0x58] sm:$0xf]
  %v39 = vld [vmem:[%s1 + $0x5c] sm:$0xf]
  %v64 = vunpack.c.l.b16 %v16
  %v65 = vunpack.c.l.b16 %v17
  %v66 = vunpack.c.l.b16 %v18
  %v67 = vunpack.c.l.b16 %v19
  %v68 = vunpack.c.l.b16 %v20
  %v69 = vunpack.c.l.b16 %v21
  %v70 = vunpack.c.l.b16 %v22
  %v71 = vunpack.c.l.b16 %v23
  %v72 = vunpack.c.l.b16 %v24
  %v73 = vunpack.c.l.b16 %v25
  %v74 = vunpack.c.l.b16 %v26
  %v75 = vunpack.c.l.b16 %v27
  %v76 = vunpack.c.l.b16 %v28
  %v77 = vunpack.c.l.b16 %v29
  %v78 = vunpack.c.l.b16 %v30
  %v79 = vunpack.c.l.b16 %v31
  %v80 = vunpack.c.l.b16 %v32
  %v81 = vunpack.c.l.b16 %v33
  %v82 = vunpack.c.l.b16 %v34
  %v83 = vunpack.c.l.b16 %v35
  %v84 = vunpack.c.l.b16 %v36
  %v85 = vunpack.c.l.b16 %v37
  %v86 = vunpack.c.l.b16 %v38
  %v87 = vunpack.c.l.b16 %v39
  %v88 = vpack.c.b16 %v65, %v64
  %v89 = vpack.c.b16 %v67, %v66
  %v90 = vpack.c.b16 %v69, %v68
  %v91 = vpack.c.b16 %v71, %v70
  %v92 = vpack.c.b16 %v73, %v72
  %v93 = vpack.c.b16 %v75, %v74
  %v94 = vpack.c.b16 %v77, %v76
  %v95 = vpack.c.b16 %v79, %v78
  %v96 = vpack.c.b16 %v81, %v80
  %v97 = vpack.c.b16 %v83, %v82
  %v98 = vpack.c.b16 %v85, %v84
  %v99 = vpack.c.b16 %v87, %v86
  %vm112 = vcmask 523264
  %v114 = vsel %vm112, %v15, 0
  %116 = vmatprep.subr.bf16.mxu0 0
  %117 = vmatpush1.bf16.msra.mxu0 %v88
  %118 = vmatprep.subr.bf16.mxu0 0
  %119 = vmatpush1.bf16.msra.mxu0 %v89
  %120 = vmatprep.subr.bf16.mxu0 0
  %121 = vmatpush1.bf16.msra.mxu0 %v90
  %122 = vmatprep.subr.bf16.mxu0 0
  %123 = vmatpush1.bf16.msra.mxu0 %v91
  %124 = vmatprep.subr.bf16.mxu0 0
  %125 = vmatpush1.bf16.msra.mxu0 %v92
  %126 = vmatprep.subr.bf16.mxu0 0
  %127 = vmatpush1.bf16.msra.mxu0 %v93
  %128 = vmatprep.subr.bf16.mxu0 0
  %129 = vmatpush1.bf16.msra.mxu0 %v94
  %130 = vmatprep.subr.bf16.mxu0 0
  %131 = vmatpush1.bf16.msra.mxu0 %v95
  %132 = vmatprep.subr.bf16.mxu0 0
  %133 = vmatpush1.bf16.msra.mxu0 %v96
  %134 = vmatprep.subr.bf16.mxu0 0
  %135 = vmatpush1.bf16.msra.mxu0 %v97
  %136 = vmatprep.subr.bf16.mxu0 0
  %137 = vmatpush1.bf16.msra.mxu0 %v98
  %138 = vmatprep.subr.bf16.mxu0 0
  %139 = vmatpush1.bf16.msra.mxu0 %v99
  %140 = vmatprep.subr.bf16.mxu0 0
  %141 = vmatpush1.bf16.msra.mxu0 0
  %142 = vmatprep.subr.bf16.mxu0 0
  %143 = vmatpush1.bf16.msra.mxu0 0
  %144 = vmatprep.subr.bf16.mxu0 0
  %145 = vmatpush1.bf16.msra.mxu0 0
  %146 = vmatprep.subr.bf16.mxu0 0
  %147 = vmatpush1.bf16.msra.mxu0 0
  %148 = vmatprep.mubr.bf16.mxu0 %v114
  %149 = vmatmul.mubr.bf16.gmra.mrb[0].mxu0 %v14
  %v150 = vpop.f32.mrb[0].mxu0
  %v151 = vadd.f32 0.0, %v150
  %v152 = vpop.f32.mrb[0].mxu0
  %v153 = vpop.f32.mrb[0].mxu0
  %v154 = vpop.f32.mrb[0].mxu0
  %155 = vdwg.mxu0
  %vm156 = vcmask 261120
  %157 = vst.msk [vmem:[%s2] sm:$0xff] %vm156, %v151
  // Predicated region
  $region10: #{encode_image.13} parent=0 // pred_check
    _
  $region11: #{encode_image.13} parent=0 // pred_check_branch
    %159 = sbr.rel (0) target = $region13
  $region12: #{encode_image.13} parent=0 // pred_region
    _
  $region13: #{encode_image.13} parent=0 // pred_fallthru
    _
  // Predicated region
  $region14: #{encode_image.13} parent=0 // pred_check
    _
  $region15: #{encode_image.13} parent=0 // pred_check_branch
    %161 = sbr.rel (0) target = $region17
  $region16: #{encode_image.13} parent=0 // pred_region
    _
  $region17: #{encode_image.13} parent=0 // pred_fallthru
    _

// kernel: encode_image.17
$region0: #{encode_image.17}
  #allocation0 [shape = 'u32[]', space=smem, size = 0x4, offset = 0x4, fixed_abs, tag = 'smem constant byte address 0x4 - core index']
  #allocation1 [shape = 'u32[144,128]{1,0:T(1,128)}', space=vmem, size = 0x12000, scoped, tag = 'internal scratch']
  %s0 = inlined_call_operand.vmem [shape: bf16[16,32], index: 0, kind: input, shape index: {}]
  %s1 = inlined_call_operand.vmem [shape: bf16[32,32], index: 1, kind: input, shape index: {}]
  %s2 = inlined_call_operand.vmem [shape: f32[1,32], index: 2, kind: input, shape index: {}]
  %s3 = inlined_call_operand.vmem [shape: f32[16,32], index: 3, kind: input, shape index: {}]
  %s4 = inlined_call_operand.vmem [shape: f32[16,32], index: 4, kind: output, shape index: {}]
  %s5 = sld [smem:[#allocation0]]
  $region26: #{encode_image.17} parent=0
    _
  %s7 = ssub.s32 1, %s5
  %s8 = scalar_select 0, %s7, %s5
  // Predicated region
  $region2: #{encode_image.17} parent=0 // pred_check
    _
  $region3: #{encode_image.17} parent=0 // pred_check_branch
    %10 = sbr.rel (0) target = $region5
  $region4: #{encode_image.17} parent=0 // pred_region
    _
  $region5: #{encode_image.17} parent=0 // pred_fallthru
    _
  // Predicated region
  $region6: #{encode_image.17} parent=0 // pred_check
    _
  $region7: #{encode_image.17} parent=0 // pred_check_branch
    %12 = sbr.rel (0) target = $region9
  $region8: #{encode_image.17} parent=0 // pred_region
    _
  $region9: #{encode_image.17} parent=0 // pred_fallthru
    _
  // Predicated region
  $region10: #{encode_image.17} parent=0 // pred_check
    _
  $region11: #{encode_image.17} parent=0 // pred_check_branch
    %14 = sbr.rel (0) target = $region13
  $region12: #{encode_image.17} parent=0 // pred_region
    _
  $region13: #{encode_image.17} parent=0 // pred_fallthru
    _
  // Predicated region
  $region14: #{encode_image.17} parent=0 // pred_check
    _
  $region15: #{encode_image.17} parent=0 // pred_check_branch
    %16 = sbr.rel (0) target = $region17
  $region16: #{encode_image.17} parent=0 // pred_region
    _
  $region17: #{encode_image.17} parent=0 // pred_fallthru
    _
  %v18 = vld [vmem:[%s0] sm:$0xf]
  %v19 = vld [vmem:[%s0 + $0x4] sm:$0xf]
  %v20 = vld [vmem:[%s1] sm:$0xf]
  %v21 = vld [vmem:[%s1 + $0x4] sm:$0xf]
  %v22 = vld [vmem:[%s1 + $0x8] sm:$0xf]
  %v23 = vld [vmem:[%s1 + $0xc] sm:$0xf]
  %v24 = vld [vmem:[%s2] sm:$0x1]
  %v26 = vlaneseq
  %v27 = vshrl.u32 %v26, 7
  %v28 = vsub.s32 0, %v27
  %v29 = vrot.slane %v24, %v28
  %v33 = vunpack.c.l.b16 %v18
  %v34 = vunpack.c.l.b16 %v19
  %v35 = vpack.c.b16 %v34, %v33
  %v40 = vunpack.c.l.b16 %v20
  %v41 = vunpack.c.l.b16 %v21
  %v42 = vunpack.c.l.b16 %v22
  %v43 = vunpack.c.l.b16 %v23
  %v44 = vpack.c.b16 %v41, %v40
  %v45 = vpack.c.b16 %v43, %v42
  %vm48 = vcmask 261120
  %v50 = vsel %vm48, %v35, 0
  %52 = vmatprep.subr.bf16.mxu0 0
  %53 = vmatpush1.bf16.msra.mxu0 %v44
  %54 = vmatprep.subr.bf16.mxu0 0
  %55 = vmatpush1.bf16.msra.mxu0 %v45
  %56 = vmatprep.subr.bf16.mxu0 0
  %57 = vmatpush1.bf16.msra.mxu0 0
  %58 = vmatprep.subr.bf16.mxu0 0
  %59 = vmatpush1.bf16.msra.mxu0 0
  %60 = vmatprep.subr.bf16.mxu0 0
  %61 = vmatpush1.bf16.msra.mxu0 0
  %62 = vmatprep.subr.bf16.mxu0 0
  %63 = vmatpush1.bf16.msra.mxu0 0
  %64 = vmatprep.subr.bf16.mxu0 0
  %65 = vmatpush1.bf16.msra.mxu0 0
  %66 = vmatprep.subr.bf16.mxu0 0
  %67 = vmatpush1.bf16.msra.mxu0 0
  %68 = vmatprep.subr.bf16.mxu0 0
  %69 = vmatpush1.bf16.msra.mxu0 0
  %70 = vmatprep.subr.bf16.mxu0 0
  %71 = vmatpush1.bf16.msra.mxu0 0
  %72 = vmatprep.subr.bf16.mxu0 0
  %73 = vmatpush1.bf16.msra.mxu0 0
  %74 = vmatprep.subr.bf16.mxu0 0
  %75 = vmatpush1.bf16.msra.mxu0 0
  %76 = vmatprep.subr.bf16.mxu0 0
  %77 = vmatpush1.bf16.msra.mxu0 0
  %78 = vmatprep.subr.bf16.mxu0 0
  %79 = vmatpush1.bf16.msra.mxu0 0
  %80 = vmatprep.subr.bf16.mxu0 0
  %81 = vmatpush1.bf16.msra.mxu0 0
  %82 = vmatprep.subr.bf16.mxu0 0
  %83 = vmatpush1.bf16.msra.mxu0 0
  %84 = vmatprep.mubr.bf16.mxu0 0
  %85 = vmatmul.mubr.bf16.gmra.mrb[0].mxu0 %v50
  %v86 = vpop.f32.mrb[0].mxu0
  %v87 = vadd.f32 %v29, %v86
  %v88 = vpop.f32.mrb[0].mxu0
  %v89 = vpop.f32.mrb[0].mxu0
  %v90 = vadd.f32 %v29, %v89
  %v91 = vpop.f32.mrb[0].mxu0
  %92 = vdwg.mxu0
  %v93 = vld [vmem:[%s3] sm:$0xff]
  %v94 = vld [vmem:[%s3 + $0x8] sm:$0xff]
  %v95 = vadd.f32 %v87, %v93
  %v96 = vadd.f32 %v90, %v94
  %97 = vst.msk [vmem:[%s4] sm:$0xff] %vm48, %v95
  %98 = vst.msk [vmem:[%s4 + $0x8] sm:$0xff] %vm48, %v96
  // Predicated region
  $region18: #{encode_image.17} parent=0 // pred_check
    _
  $region19: #{encode_image.17} parent=0 // pred_check_branch
    %100 = sbr.rel (0) target = $region21
  $region20: #{encode_image.17} parent=0 // pred_region
    _
  $region21: #{encode_image.17} parent=0 // pred_fallthru
    _
  // Predicated region
  $region22: #{encode_image.17} parent=0 // pred_check
    _
  $region23: #{encode_image.17} parent=0 // pred_check_branch
    %102 = sbr.rel (0) target = $region25
  $region24: #{encode_image.17} parent=0 // pred_region
    _
  $region25: #{encode_image.17} parent=0 // pred_fallthru
    _

// kernel: encode_image.16
$region0: #{encode_image.16}
  #allocation0 [shape = 'u32[]', space=smem, size = 0x4, offset = 0x4, fixed_abs, tag = 'smem constant byte address 0x4 - core index']
  #allocation1 [shape = 'u32[144,128]{1,0:T(1,128)}', space=vmem, size = 0x12000, scoped, tag = 'internal scratch']
  %s0 = inlined_call_operand.vmem [shape: bf16[2,8,32], index: 0, kind: input, shape index: {}]
  %s1 = inlined_call_operand.vmem [shape: bf16[2,8,32], index: 1, kind: input, shape index: {}]
  %s2 = inlined_call_operand.vmem [shape: bf16[2,8,32], index: 2, kind: input, shape index: {}]
  %s3 = inlined_call_operand.vmem [shape: bf16[2,8,32], index: 3, kind: output, shape index: {}]
  %s4 = sld [smem:[#allocation0]]
  $region22: #{encode_image.16} parent=0
    _
  %s6 = ssub.s32 1, %s4
  %s7 = scalar_select 0, %s6, %s4
  // Predicated region
  $region2: #{encode_image.16} parent=0 // pred_check
    _
  $region3: #{encode_image.16} parent=0 // pred_check_branch
    %9 = sbr.rel (0) target = $region5
  $region4: #{encode_image.16} parent=0 // pred_region
    _
  $region5: #{encode_image.16} parent=0 // pred_fallthru
    _
  // Predicated region
  $region6: #{encode_image.16} parent=0 // pred_check
    _
  $region7: #{encode_image.16} parent=0 // pred_check_branch
    %11 = sbr.rel (0) target = $region9
  $region8: #{encode_image.16} parent=0 // pred_region
    _
  $region9: #{encode_image.16} parent=0 // pred_fallthru
    _
  // Predicated region
  $region10: #{encode_image.16} parent=0 // pred_check
    _
  $region11: #{encode_image.16} parent=0 // pred_check_branch
    %13 = sbr.rel (0) target = $region13
  $region12: #{encode_image.16} parent=0 // pred_region
    _
  $region13: #{encode_image.16} parent=0 // pred_fallthru
    _
  %v15 = vld [vmem:[%s0] sm:$0xf]
  %v16 = vld [vmem:[%s0 + $0x4] sm:$0xf]
  %v17 = vld [vmem:[%s1] sm:$0xf]
  %v18 = vld [vmem:[%s1 + $0x4] sm:$0xf]
  %v19 = vld [vmem:[%s2] sm:$0xf]
  %v20 = vld [vmem:[%s2 + $0x4] sm:$0xf]
  %v21 = vlaneseq
  %v22 = vand.u32 %v21, 127
  %vm23 = vcmp.lt.s32.totalorder %v22, 5
  %vm24 = vcmask 64512
  %v26 = vsel %vm24, %v15, 0
  %v29 = vsel %vm24, %v17, 0
  %31 = vmatprep.subr.bf16.mxu0 0
  %32 = vmatpush1.bf16.xpose.msra.mxu0 %v29
  %33 = vmatprep.subr.bf16.mxu0 0
  %34 = vmatpush1.bf16.xpose.msra.mxu0 0
  %35 = vmatprep.subr.bf16.mxu0 0
  %36 = vmatpush1.bf16.xpose.msra.mxu0 0
  %37 = vmatprep.subr.bf16.mxu0 0
  %38 = vmatpush1.bf16.xpose.msra.mxu0 0
  %39 = vmatprep.subr.bf16.mxu0 0
  %40 = vmatpush1.bf16.xpose.msra.mxu0 0
  %41 = vmatprep.subr.bf16.mxu0 0
  %42 = vmatpush1.bf16.xpose.msra.mxu0 0
  %43 = vmatprep.subr.bf16.mxu0 0
  %44 = vmatpush1.bf16.xpose.msra.mxu0 0
  %45 = vmatprep.subr.bf16.mxu0 0
  %46 = vmatpush1.bf16.xpose.msra.mxu0 0
  %47 = vmatprep.subr.bf16.mxu0 0
  %48 = vmatpush1.bf16.xpose.msra.mxu0 0
  %49 = vmatprep.subr.bf16.mxu0 0
  %50 = vmatpush1.bf16.xpose.msra.mxu0 0
  %51 = vmatprep.subr.bf16.mxu0 0
  %52 = vmatpush1.bf16.xpose.msra.mxu0 0
  %53 = vmatprep.subr.bf16.mxu0 0
  %54 = vmatpush1.bf16.xpose.msra.mxu0 0
  %55 = vmatprep.subr.bf16.mxu0 0
  %56 = vmatpush1.bf16.xpose.msra.mxu0 0
  %57 = vmatprep.subr.bf16.mxu0 0
  %58 = vmatpush1.bf16.xpose.msra.mxu0 0
  %59 = vmatprep.subr.bf16.mxu0 0
  %60 = vmatpush1.bf16.xpose.msra.mxu0 0
  %61 = vmatprep.subr.bf16.mxu0 0
  %62 = vmatpush1.bf16.xpose.msra.mxu0 0
  %63 = vmatprep.mubr.bf16.mxu0 0
  %64 = vmatmul.mubr.bf16.gmra.mrb[0].mxu0 %v26
  %v65 = vpop.f32.mrb[0].mxu0
  %v66 = vadd.f32 0.0, %v65
  %v67 = vpop.f32.mrb[0].mxu0
  %v68 = vpop.f32.mrb[0].mxu0
  %v69 = vpop.f32.mrb[0].mxu0
  %70 = vdwg.mxu0
  %v72 = vsel %vm24, %v16, 0
  %v75 = vsel %vm24, %v18, 0
  %77 = vmatprep.subr.bf16.mxu0 0
  %78 = vmatpush1.bf16.xpose.msra.mxu0 %v75
  %79 = vmatprep.subr.bf16.mxu0 0
  %80 = vmatpush1.bf16.xpose.msra.mxu0 0
  %81 = vmatprep.subr.bf16.mxu0 0
  %82 = vmatpush1.bf16.xpose.msra.mxu0 0
  %83 = vmatprep.subr.bf16.mxu0 0
  %84 = vmatpush1.bf16.xpose.msra.mxu0 0
  %85 = vmatprep.subr.bf16.mxu0 0
  %86 = vmatpush1.bf16.xpose.msra.mxu0 0
  %87 = vmatprep.subr.bf16.mxu0 0
  %88 = vmatpush1.bf16.xpose.msra.mxu0 0
  %89 = vmatprep.subr.bf16.mxu0 0
  %90 = vmatpush1.bf16.xpose.msra.mxu0 0
  %91 = vmatprep.subr.bf16.mxu0 0
  %92 = vmatpush1.bf16.xpose.msra.mxu0 0
  %93 = vmatprep.subr.bf16.mxu0 0
  %94 = vmatpush1.bf16.xpose.msra.mxu0 0
  %95 = vmatprep.subr.bf16.mxu0 0
  %96 = vmatpush1.bf16.xpose.msra.mxu0 0
  %97 = vmatprep.subr.bf16.mxu0 0
  %98 = vmatpush1.bf16.xpose.msra.mxu0 0
  %99 = vmatprep.subr.bf16.mxu0 0
  %100 = vmatpush1.bf16.xpose.msra.mxu0 0
  %101 = vmatprep.subr.bf16.mxu0 0
  %102 = vmatpush1.bf16.xpose.msra.mxu0 0
  %103 = vmatprep.subr.bf16.mxu0 0
  %104 = vmatpush1.bf16.xpose.msra.mxu0 0
  %105 = vmatprep.subr.bf16.mxu0 0
  %106 = vmatpush1.bf16.xpose.msra.mxu0 0
  %107 = vmatprep.subr.bf16.mxu0 0
  %108 = vmatpush1.bf16.xpose.msra.mxu0 0
  %109 = vmatprep.mubr.bf16.mxu0 0
  %110 = vmatmul.mubr.bf16.gmra.mrb[0].mxu0 %v72
  %v111 = vpop.f32.mrb[0].mxu0
  %v112 = vadd.f32 0.0, %v111
  %v113 = vpop.f32.mrb[0].mxu0
  %v114 = vpop.f32.mrb[0].mxu0
  %v115 = vpop.f32.mrb[0].mxu0
  %116 = vdwg.mxu0
  %v117 = vsel %vm23, 1, 0
  %vm118 = vcmp.eq.s32.totalorder %v117, 1
  %v119 = vsel %vm118, %v66, -1e+30
  %v120 = vsel %vm118, %v112, -1e+30
  %v121 = vsel %vm24, %v119, -inf
  %122 = vmax.xlane.f32.xlu0 %v121
  %v123 = vpop.xlane.xlu0 %122
  %v124 = vsel %vm24, %v120, -inf
  %125 = vmax.xlane.f32.xlu0 %v124
  %v126 = vpop.xlane.xlu0 %125
  %v127 = vsub.f32 %v119, %v123
  %v128 = vsub.f32 %v120, %v126
  %v129 = vmul.f32 %v127, 1.442695
  %v130 = vpow.pop %v129
  %v131 = vmul.f32 %v128, 1.442695
  %v132 = vpow.pop %v131
  %v133 = vsel %vm24, %v130, 0.0
  %134 = vadd.xlane.f32.xlu0 %v133
  %v135 = vpop.xlane.xlu0 %134
  %v136 = vsel %vm24, %v132, 0.0
  %137 = vadd.xlane.f32.xlu0 %v136
  %v138 = vpop.xlane.xlu0 %137
  %v139 = vrcp.pop %v135
  %v140 = vmul.f32 %v130, %v139
  %v141 = vrcp.pop %v138
  %v142 = vmul.f32 %v132, %v141
  %v143 = vpack.c.bf16 %v140, %v140
  %v144 = vpack.c.bf16 %v142, %v142
  %v146 = vsel %vm24, %v143, 0
  %vm148 = vcmask 1043456
  %v150 = vsel %vm148, %v19, 0
  %152 = vmatprep.subr.bf16.mxu0 0
  %153 = vmatpush1.bf16.msra.mxu0 %v150
  %154 = vmatprep.subr.bf16.mxu0 0
  %155 = vmatpush1.bf16.msra.mxu0 0
  %156 = vmatprep.subr.bf16.mxu0 0
  %157 = vmatpush1.bf16.msra.mxu0 0
  %158 = vmatprep.subr.bf16.mxu0 0
  %159 = vmatpush1.bf16.msra.mxu0 0
  %160 = vmatprep.subr.bf16.mxu0 0
  %161 = vmatpush1.bf16.msra.mxu0 0
  %162 = vmatprep.subr.bf16.mxu0 0
  %163 = vmatpush1.bf16.msra.mxu0 0
  %164 = vmatprep.subr.bf16.mxu0 0
  %165 = vmatpush1.bf16.msra.mxu0 0
  %166 = vmatprep.subr.bf16.mxu0 0
  %167 = vmatpush1.bf16.msra.mxu0 0
  %168 = vmatprep.subr.bf16.mxu0 0
  %169 = vmatpush1.bf16.msra.mxu0 0
  %170 = vmatprep.subr.bf16.mxu0 0
  %171 = vmatpush1.bf16.msra.mxu0 0
  %172 = vmatprep.subr.bf16.mxu0 0
  %173 = vmatpush1.bf16.msra.mxu0 0
  %174 = vmatprep.subr.bf16.mxu0 0
  %175 = vmatpush1.bf16.msra.mxu0 0
  %176 = vmatprep.subr.bf16.mxu0 0
  %177 = vmatpush1.bf16.msra.mxu0 0
  %178 = vmatprep.subr.bf16.mxu0 0
  %179 = vmatpush1.bf16.msra.mxu0 0
  %180 = vmatprep.subr.bf16.mxu0 0
  %181 = vmatpush1.bf16.msra.mxu0 0
  %182 = vmatprep.subr.bf16.mxu0 0
  %183 = vmatpush1.bf16.msra.mxu0 0
  %184 = vmatprep.mubr.bf16.mxu0 0
  %185 = vmatmul.mubr.bf16.gmra.mrb[0].mxu0 %v146
  %v186 = vpop.f32.mrb[0].mxu0
  %v187 = vadd.f32 0.0, %v186
  %v188 = vpop.f32.mrb[0].mxu0
  %v189 = vpop.f32.mrb[0].mxu0
  %v190 = vpop.f32.mrb[0].mxu0
  %191 = vdwg.mxu0
  %v193 = vsel %vm24, %v144, 0
  %v196 = vsel %vm148, %v20, 0
  %198 = vmatprep.subr.bf16.mxu0 0
  %199 = vmatpush1.bf16.msra.mxu0 %v196
  %200 = vmatprep.subr.bf16.mxu0 0
  %201 = vmatpush1.bf16.msra.mxu0 0
  %202 = vmatprep.subr.bf16.mxu0 0
  %203 = vmatpush1.bf16.msra.mxu0 0
  %204 = vmatprep.subr.bf16.mxu0 0
  %205 = vmatpush1.bf16.msra.mxu0 0
  %206 = vmatprep.subr.bf16.mxu0 0
  %207 = vmatpush1.bf16.msra.mxu0 0
  %208 = vmatprep.subr.bf16.mxu0 0
  %209 = vmatpush1.bf16.msra.mxu0 0
  %210 = vmatprep.subr.bf16.mxu0 0
  %211 = vmatpush1.bf16.msra.mxu0 0
  %212 = vmatprep.subr.bf16.mxu0 0
  %213 = vmatpush1.bf16.msra.mxu0 0
  %214 = vmatprep.subr.bf16.mxu0 0
  %215 = vmatpush1.bf16.msra.mxu0 0
  %216 = vmatprep.subr.bf16.mxu0 0
  %217 = vmatpush1.bf16.msra.mxu0 0
  %218 = vmatprep.subr.bf16.mxu0 0
  %219 = vmatpush1.bf16.msra.mxu0 0
  %220 = vmatprep.subr.bf16.mxu0 0
  %221 = vmatpush1.bf16.msra.mxu0 0
  %222 = vmatprep.subr.bf16.mxu0 0
  %223 = vmatpush1.bf16.msra.mxu0 0
  %224 = vmatprep.subr.bf16.mxu0 0
  %225 = vmatpush1.bf16.msra.mxu0 0
  %226 = vmatprep.subr.bf16.mxu0 0
  %227 = vmatpush1.bf16.msra.mxu0 0
  %228 = vmatprep.subr.bf16.mxu0 0
  %229 = vmatpush1.bf16.msra.mxu0 0
  %230 = vmatprep.mubr.bf16.mxu0 0
  %231 = vmatmul.mubr.bf16.gmra.mrb[0].mxu0 %v193
  %v232 = vpop.f32.mrb[0].mxu0
  %v233 = vadd.f32 0.0, %v232
  %v234 = vpop.f32.mrb[0].mxu0
  %v235 = vpop.f32.mrb[0].mxu0
  %v236 = vpop.f32.mrb[0].mxu0
  %237 = vdwg.mxu0
  %v238 = vpack.c.bf16 %v187, %v187
  %v239 = vpack.c.bf16 %v233, %v233
  %vm240 = vcmask 60416
  %241 = vst.msk [vmem:[%s3] sm:$0xf] %vm240, %v238
  %242 = vst.msk [vmem:[%s3 + $0x4] sm:$0xf] %vm240, %v239
  %v244 = vunpack.c.l.b16 %v15
  %v245 = vpack.c.b16 %v244, %v244
  %246 = vrot.lane.b32.xlu0 %v245, 120
  %v247 = vpop.permute.xlu0 %246
  %v249 = vunpack.c.l.b16 %v17
  %v250 = vpack.c.b16 %v249, %v249
  %251 = vrot.lane.b32.xlu0 %v250, 120
  %v252 = vpop.permute.xlu0 %251
  %v254 = vsel %vm24, %v247, 0
  %v257 = vsel %vm24, %v252, 0
  %259 = vmatprep.subr.bf16.mxu0 0
  %260 = vmatpush1.bf16.xpose.msra.mxu0 %v257
  %261 = vmatprep.subr.bf16.mxu0 0
  %262 = vmatpush1.bf16.xpose.msra.mxu0 0
  %263 = vmatprep.subr.bf16.mxu0 0
  %264 = vmatpush1.bf16.xpose.msra.mxu0 0
  %265 = vmatprep.subr.bf16.mxu0 0
  %266 = vmatpush1.bf16.xpose.msra.mxu0 0
  %267 = vmatprep.subr.bf16.mxu0 0
  %268 = vmatpush1.bf16.xpose.msra.mxu0 0
  %269 = vmatprep.subr.bf16.mxu0 0
  %270 = vmatpush1.bf16.xpose.msra.mxu0 0
  %271 = vmatprep.subr.bf16.mxu0 0
  %272 = vmatpush1.bf16.xpose.msra.mxu0 0
  %273 = vmatprep.subr.bf16.mxu0 0
  %274 = vmatpush1.bf16.xpose.msra.mxu0 0
  %275 = vmatprep.subr.bf16.mxu0 0
  %276 = vmatpush1.bf16.xpose.msra.mxu0 0
  %277 = vmatprep.subr.bf16.mxu0 0
  %278 = vmatpush1.bf16.xpose.msra.mxu0 0
  %279 = vmatprep.subr.bf16.mxu0 0
  %280 = vmatpush1.bf16.xpose.msra.mxu0 0
  %281 = vmatprep.subr.bf16.mxu0 0
  %282 = vmatpush1.bf16.xpose.msra.mxu0 0
  %283 = vmatprep.subr.bf16.mxu0 0
  %284 = vmatpush1.bf16.xpose.msra.mxu0 0
  %285 = vmatprep.subr.bf16.mxu0 0
  %286 = vmatpush1.bf16.xpose.msra.mxu0 0
  %287 = vmatprep.subr.bf16.mxu0 0
  %288 = vmatpush1.bf16.xpose.msra.mxu0 0
  %289 = vmatprep.subr.bf16.mxu0 0
  %290 = vmatpush1.bf16.xpose.msra.mxu0 0
  %291 = vmatprep.mubr.bf16.mxu0 0
  %292 = vmatmul.mubr.bf16.gmra.mrb[0].mxu0 %v254
  %v293 = vpop.f32.mrb[0].mxu0
  %v294 = vadd.f32 0.0, %v293
  %v295 = vpop.f32.mrb[0].mxu0
  %v296 = vpop.f32.mrb[0].mxu0
  %v297 = vpop.f32.mrb[0].mxu0
  %298 = vdwg.mxu0
  %v300 = vunpack.c.l.b16 %v16
  %v301 = vpack.c.b16 %v300, %v300
  %302 = vrot.lane.b32.xlu0 %v301, 120
  %v303 = vpop.permute.xlu0 %302
  %v305 = vunpack.c.l.b16 %v18
  %v306 = vpack.c.b16 %v305, %v305
  %307 = vrot.lane.b32.xlu0 %v306, 120
  %v308 = vpop.permute.xlu0 %307
  %v310 = vsel %vm24, %v303, 0
  %v313 = vsel %vm24, %v308, 0
  %315 = vmatprep.subr.bf16.mxu0 0
  %316 = vmatpush1.bf16.xpose.msra.mxu0 %v313
  %317 = vmatprep.subr.bf16.mxu0 0
  %318 = vmatpush1.bf16.xpose.msra.mxu0 0
  %319 = vmatprep.subr.bf16.mxu0 0
  %320 = vmatpush1.bf16.xpose.msra.mxu0 0
  %321 = vmatprep.subr.bf16.mxu0 0
  %322 = vmatpush1.bf16.xpose.msra.mxu0 0
  %323 = vmatprep.subr.bf16.mxu0 0
  %324 = vmatpush1.bf16.xpose.msra.mxu0 0
  %325 = vmatprep.subr.bf16.mxu0 0
  %326 = vmatpush1.bf16.xpose.msra.mxu0 0
  %327 = vmatprep.subr.bf16.mxu0 0
  %328 = vmatpush1.bf16.xpose.msra.mxu0 0
  %329 = vmatprep.subr.bf16.mxu0 0
  %330 = vmatpush1.bf16.xpose.msra.mxu0 0
  %331 = vmatprep.subr.bf16.mxu0 0
  %332 = vmatpush1.bf16.xpose.msra.mxu0 0
  %333 = vmatprep.subr.bf16.mxu0 0
  %334 = vmatpush1.bf16.xpose.msra.mxu0 0
  %335 = vmatprep.subr.bf16.mxu0 0
  %336 = vmatpush1.bf16.xpose.msra.mxu0 0
  %337 = vmatprep.subr.bf16.mxu0 0
  %338 = vmatpush1.bf16.xpose.msra.mxu0 0
  %339 = vmatprep.subr.bf16.mxu0 0
  %340 = vmatpush1.bf16.xpose.msra.mxu0 0
  %341 = vmatprep.subr.bf16.mxu0 0
  %342 = vmatpush1.bf16.xpose.msra.mxu0 0
  %343 = vmatprep.subr.bf16.mxu0 0
  %344 = vmatpush1.bf16.xpose.msra.mxu0 0
  %345 = vmatprep.subr.bf16.mxu0 0
  %346 = vmatpush1.bf16.xpose.msra.mxu0 0
  %347 = vmatprep.mubr.bf16.mxu0 0
  %348 = vmatmul.mubr.bf16.gmra.mrb[0].mxu0 %v310
  %v349 = vpop.f32.mrb[0].mxu0
  %v350 = vadd.f32 0.0, %v349
  %v351 = vpop.f32.mrb[0].mxu0
  %v352 = vpop.f32.mrb[0].mxu0
  %v353 = vpop.f32.mrb[0].mxu0
  %354 = vdwg.mxu0
  %v355 = vsel %vm118, %v294, -1e+30
  %v356 = vsel %vm118, %v350, -1e+30
  %v357 = vsel %vm24, %v355, -inf
  %358 = vmax.xlane.f32.xlu0 %v357
  %v359 = vpop.xlane.xlu0 %358
  %v360 = vsel %vm24, %v356, -inf
  %361 = vmax.xlane.f32.xlu0 %v360
  %v362 = vpop.xlane.xlu0 %361
  %v363 = vsub.f32 %v355, %v359
  %v364 = vsub.f32 %v356, %v362
  %v365 = vmul.f32 %v363, 1.442695
  %v366 = vpow.pop %v365
  %v367 = vmul.f32 %v364, 1.442695
  %v368 = vpow.pop %v367
  %v369 = vsel %vm24, %v366, 0.0
  %370 = vadd.xlane.f32.xlu0 %v369
  %v371 = vpop.xlane.xlu0 %370
  %v372 = vsel %vm24, %v368, 0.0
  %373 = vadd.xlane.f32.xlu0 %v372
  %v374 = vpop.xlane.xlu0 %373
  %v375 = vrcp.pop %v371
  %v376 = vmul.f32 %v366, %v375
  %v377 = vrcp.pop %v374
  %v378 = vmul.f32 %v368, %v377
  %v379 = vpack.c.bf16 %v376, %v376
  %v380 = vpack.c.bf16 %v378, %v378
  %v382 = vunpack.c.l.b16 %v19
  %v383 = vpack.c.b16 %v382, %v382
  %384 = vrot.lane.b32.xlu0 %v383, 120
  %v385 = vpop.permute.xlu0 %384
  %v387 = vsel %vm24, %v379, 0
  %v390 = vsel %vm148, %v385, 0
  %392 = vmatprep.subr.bf16.mxu0 0
  %393 = vmatpush1.bf16.msra.mxu0 %v390
  %394 = vmatprep.subr.bf16.mxu0 0
  %395 = vmatpush1.bf16.msra.mxu0 0
  %396 = vmatprep.subr.bf16.mxu0 0
  %397 = vmatpush1.bf16.msra.mxu0 0
  %398 = vmatprep.subr.bf16.mxu0 0
  %399 = vmatpush1.bf16.msra.mxu0 0
  %400 = vmatprep.subr.bf16.mxu0 0
  %401 = vmatpush1.bf16.msra.mxu0 0
  %402 = vmatprep.subr.bf16.mxu0 0
  %403 = vmatpush1.bf16.msra.mxu0 0
  %404 = vmatprep.subr.bf16.mxu0 0
  %405 = vmatpush1.bf16.msra.mxu0 0
  %406 = vmatprep.subr.bf16.mxu0 0
  %407 = vmatpush1.bf16.msra.mxu0 0
  %408 = vmatprep.subr.bf16.mxu0 0
  %409 = vmatpush1.bf16.msra.mxu0 0
  %410 = vmatprep.subr.bf16.mxu0 0
  %411 = vmatpush1.bf16.msra.mxu0 0
  %412 = vmatprep.subr.bf16.mxu0 0
  %413 = vmatpush1.bf16.msra.mxu0 0
  %414 = vmatprep.subr.bf16.mxu0 0
  %415 = vmatpush1.bf16.msra.mxu0 0
  %416 = vmatprep.subr.bf16.mxu0 0
  %417 = vmatpush1.bf16.msra.mxu0 0
  %418 = vmatprep.subr.bf16.mxu0 0
  %419 = vmatpush1.bf16.msra.mxu0 0
  %420 = vmatprep.subr.bf16.mxu0 0
  %421 = vmatpush1.bf16.msra.mxu0 0
  %422 = vmatprep.subr.bf16.mxu0 0
  %423 = vmatpush1.bf16.msra.mxu0 0
  %424 = vmatprep.mubr.bf16.mxu0 0
  %425 = vmatmul.mubr.bf16.gmra.mrb[0].mxu0 %v387
  %v426 = vpop.f32.mrb[0].mxu0
  %v427 = vadd.f32 0.0, %v426
  %v428 = vpop.f32.mrb[0].mxu0
  %v429 = vpop.f32.mrb[0].mxu0
  %v430 = vpop.f32.mrb[0].mxu0
  %431 = vdwg.mxu0
  %v433 = vunpack.c.l.b16 %v20
  %v434 = vpack.c.b16 %v433, %v433
  %435 = vrot.lane.b32.xlu0 %v434, 120
  %v436 = vpop.permute.xlu0 %435
  %v438 = vsel %vm24, %v380, 0
  %v441 = vsel %vm148, %v436, 0
  %443 = vmatprep.subr.bf16.mxu0 0
  %444 = vmatpush1.bf16.msra.mxu0 %v441
  %445 = vmatprep.subr.bf16.mxu0 0
  %446 = vmatpush1.bf16.msra.mxu0 0
  %447 = vmatprep.subr.bf16.mxu0 0
  %448 = vmatpush1.bf16.msra.mxu0 0
  %449 = vmatprep.subr.bf16.mxu0 0
  %450 = vmatpush1.bf16.msra.mxu0 0
  %451 = vmatprep.subr.bf16.mxu0 0
  %452 = vmatpush1.bf16.msra.mxu0 0
  %453 = vmatprep.subr.bf16.mxu0 0
  %454 = vmatpush1.bf16.msra.mxu0 0
  %455 = vmatprep.subr.bf16.mxu0 0
  %456 = vmatpush1.bf16.msra.mxu0 0
  %457 = vmatprep.subr.bf16.mxu0 0
  %458 = vmatpush1.bf16.msra.mxu0 0
  %459 = vmatprep.subr.bf16.mxu0 0
  %460 = vmatpush1.bf16.msra.mxu0 0
  %461 = vmatprep.subr.bf16.mxu0 0
  %462 = vmatpush1.bf16.msra.mxu0 0
  %463 = vmatprep.subr.bf16.mxu0 0
  %464 = vmatpush1.bf16.msra.mxu0 0
  %465 = vmatprep.subr.bf16.mxu0 0
  %466 = vmatpush1.bf16.msra.mxu0 0
  %467 = vmatprep.subr.bf16.mxu0 0
  %468 = vmatpush1.bf16.msra.mxu0 0
  %469 = vmatprep.subr.bf16.mxu0 0
  %470 = vmatpush1.bf16.msra.mxu0 0
  %471 = vmatprep.subr.bf16.mxu0 0
  %472 = vmatpush1.bf16.msra.mxu0 0
  %473 = vmatprep.subr.bf16.mxu0 0
  %474 = vmatpush1.bf16.msra.mxu0 0
  %475 = vmatprep.mubr.bf16.mxu0 0
  %476 = vmatmul.mubr.bf16.gmra.mrb[0].mxu0 %v438
  %v477 = vpop.f32.mrb[0].mxu0
  %v478 = vadd.f32 0.0, %v477
  %v479 = vpop.f32.mrb[0].mxu0
  %v480 = vpop.f32.mrb[0].mxu0
  %v481 = vpop.f32.mrb[0].mxu0
  %482 = vdwg.mxu0
  %v483 = vpack.c.bf16 %v427, %v427
  %v484 = vpack.c.bf16 %v478, %v478
  %v487 = vunpack.c.l.b16 %v483
  %v488 = vunpack.c.l.b16 %v484
  %v489 = vpack.c.b16 %v487, %v487
  %v490 = vpack.c.b16 %v488, %v488
  %491 = vrot.lane.b32.xlu0 %v489, 8
  %v492 = vpop.permute.xlu0 %491
  %493 = vrot.lane.b32.xlu0 %v490, 8
  %v494 = vpop.permute.xlu0 %493
  %vm497 = vcmask 126016
  %498 = vst.msk [vmem:[%s3] sm:$0xf] %vm497, %v492
  %499 = vst.msk [vmem:[%s3 + $0x4] sm:$0xf] %vm497, %v494
  %500 = vrot.lane.b32.xlu0 %v245, 112
  %v501 = vpop.permute.xlu0 %500
  %502 = vrot.lane.b32.xlu0 %v250, 112
  %v503 = vpop.permute.xlu0 %502
  %v505 = vsel %vm24, %v501, 0
  %v508 = vsel %vm24, %v503, 0
  %510 = vmatprep.subr.bf16.mxu0 0
  %511 = vmatpush1.bf16.xpose.msra.mxu0 %v508
  %512 = vmatprep.subr.bf16.mxu0 0
  %513 = vmatpush1.bf16.xpose.msra.mxu0 0
  %514 = vmatprep.subr.bf16.mxu0 0
  %515 = vmatpush1.bf16.xpose.msra.mxu0 0
  %516 = vmatprep.subr.bf16.mxu0 0
  %517 = vmatpush1.bf16.xpose.msra.mxu0 0
  %518 = vmatprep.subr.bf16.mxu0 0
  %519 = vmatpush1.bf16.xpose.msra.mxu0 0
  %520 = vmatprep.subr.bf16.mxu0 0
  %521 = vmatpush1.bf16.xpose.msra.mxu0 0
  %522 = vmatprep.subr.bf16.mxu0 0
  %523 = vmatpush1.bf16.xpose.msra.mxu0 0
  %524 = vmatprep.subr.bf16.mxu0 0
  %525 = vmatpush1.bf16.xpose.msra.mxu0 0
  %526 = vmatprep.subr.bf16.mxu0 0
  %527 = vmatpush1.bf16.xpose.msra.mxu0 0
  %528 = vmatprep.subr.bf16.mxu0 0
  %529 = vmatpush1.bf16.xpose.msra.mxu0 0
  %530 = vmatprep.subr.bf16.mxu0 0
  %531 = vmatpush1.bf16.xpose.msra.mxu0 0
  %532 = vmatprep.subr.bf16.mxu0 0
  %533 = vmatpush1.bf16.xpose.msra.mxu0 0
  %534 = vmatprep.subr.bf16.mxu0 0
  %535 = vmatpush1.bf16.xpose.msra.mxu0 0
  %536 = vmatprep.subr.bf16.mxu0 0
  %537 = vmatpush1.bf16.xpose.msra.mxu0 0
  %538 = vmatprep.subr.bf16.mxu0 0
  %539 = vmatpush1.bf16.xpose.msra.mxu0 0
  %540 = vmatprep.subr.bf16.mxu0 0
  %541 = vmatpush1.bf16.xpose.msra.mxu0 0
  %542 = vmatprep.mubr.bf16.mxu0 0
  %543 = vmatmul.mubr.bf16.gmra.mrb[0].mxu0 %v505
  %v544 = vpop.f32.mrb[0].mxu0
  %v545 = vadd.f32 0.0, %v544
  %v546 = vpop.f32.mrb[0].mxu0
  %v547 = vpop.f32.mrb[0].mxu0
  %v548 = vpop.f32.mrb[0].mxu0
  %549 = vdwg.mxu0
  %550 = vrot.lane.b32.xlu0 %v301, 112
  %v551 = vpop.permute.xlu0 %550
  %552 = vrot.lane.b32.xlu0 %v306, 112
  %v553 = vpop.permute.xlu0 %552
  %v555 = vsel %vm24, %v551, 0
  %v558 = vsel %vm24, %v553, 0
  %560 = vmatprep.subr.bf16.mxu0 0
  %561 = vmatpush1.bf16.xpose.msra.mxu0 %v558
  %562 = vmatprep.subr.bf16.mxu0 0
  %563 = vmatpush1.bf16.xpose.msra.mxu0 0
  %564 = vmatprep.subr.bf16.mxu0 0
  %565 = vmatpush1.bf16.xpose.msra.mxu0 0
  %566 = vmatprep.subr.bf16.mxu0 0
  %567 = vmatpush1.bf16.xpose.msra.mxu0 0
  %568 = vmatprep.subr.bf16.mxu0 0
  %569 = vmatpush1.bf16.xpose.msra.mxu0 0
  %570 = vmatprep.subr.bf16.mxu0 0
  %571 = vmatpush1.bf16.xpose.msra.mxu0 0
  %572 = vmatprep.subr.bf16.mxu0 0
  %573 = vmatpush1.bf16.xpose.msra.mxu0 0
  %574 = vmatprep.subr.bf16.mxu0 0
  %575 = vmatpush1.bf16.xpose.msra.mxu0 0
  %576 = vmatprep.subr.bf16.mxu0 0
  %577 = vmatpush1.bf16.xpose.msra.mxu0 0
  %578 = vmatprep.subr.bf16.mxu0 0
  %579 = vmatpush1.bf16.xpose.msra.mxu0 0
  %580 = vmatprep.subr.bf16.mxu0 0
  %581 = vmatpush1.bf16.xpose.msra.mxu0 0
  %582 = vmatprep.subr.bf16.mxu0 0
  %583 = vmatpush1.bf16.xpose.msra.mxu0 0
  %584 = vmatprep.subr.bf16.mxu0 0
  %585 = vmatpush1.bf16.xpose.msra.mxu0 0
  %586 = vmatprep.subr.bf16.mxu0 0
  %587 = vmatpush1.bf16.xpose.msra.mxu0 0
  %588 = vmatprep.subr.bf16.mxu0 0
  %589 = vmatpush1.bf16.xpose.msra.mxu0 0
  %590 = vmatprep.subr.bf16.mxu0 0
  %591 = vmatpush1.bf16.xpose.msra.mxu0 0
  %592 = vmatprep.mubr.bf16.mxu0 0
  %593 = vmatmul.mubr.bf16.gmra.mrb[0].mxu0 %v555
  %v594 = vpop.f32.mrb[0].mxu0
  %v595 = vadd.f32 0.0, %v594
  %v596 = vpop.f32.mrb[0].mxu0
  %v597 = vpop.f32.mrb[0].mxu0
  %v598 = vpop.f32.mrb[0].mxu0
  %599 = vdwg.mxu0
  %v600 = vsel %vm118, %v545, -1e+30
  %v601 = vsel %vm118, %v595, -1e+30
  %v602 = vsel %vm24, %v600, -inf
  %603 = vmax.xlane.f32.xlu0 %v602
  %v604 = vpop.xlane.xlu0 %603
  %v605 = vsel %vm24, %v601, -inf
  %606 = vmax.xlane.f32.xlu0 %v605
  %v607 = vpop.xlane.xlu0 %606
  %v608 = vsub.f32 %v600, %v604
  %v609 = vsub.f32 %v601, %v607
  %v610 = vmul.f32 %v608, 1.442695
  %v611 = vpow.pop %v610
  %v612 = vmul.f32 %v609, 1.442695
  %v613 = vpow.pop %v612
  %v614 = vsel %vm24, %v611, 0.0
  %615 = vadd.xlane.f32.xlu0 %v614
  %v616 = vpop.xlane.xlu0 %615
  %v617 = vsel %vm24, %v613, 0.0
  %618 = vadd.xlane.f32.xlu0 %v617
  %v619 = vpop.xlane.xlu0 %618
  %v620 = vrcp.pop %v616
  %v621 = vmul.f32 %v611, %v620
  %v622 = vrcp.pop %v619
  %v623 = vmul.f32 %v613, %v622
  %v624 = vpack.c.bf16 %v621, %v621
  %v625 = vpack.c.bf16 %v623, %v623
  %626 = vrot.lane.b32.xlu0 %v383, 112
  %v627 = vpop.permute.xlu0 %626
  %v629 = vsel %vm24, %v624, 0
  %v632 = vsel %vm148, %v627, 0
  %634 = vmatprep.subr.bf16.mxu0 0
  %635 = vmatpush1.bf16.msra.mxu0 %v632
  %636 = vmatprep.subr.bf16.mxu0 0
  %637 = vmatpush1.bf16.msra.mxu0 0
  %638 = vmatprep.subr.bf16.mxu0 0
  %639 = vmatpush1.bf16.msra.mxu0 0
  %640 = vmatprep.subr.bf16.mxu0 0
  %641 = vmatpush1.bf16.msra.mxu0 0
  %642 = vmatprep.subr.bf16.mxu0 0
  %643 = vmatpush1.bf16.msra.mxu0 0
  %644 = vmatprep.subr.bf16.mxu0 0
  %645 = vmatpush1.bf16.msra.mxu0 0
  %646 = vmatprep.subr.bf16.mxu0 0
  %647 = vmatpush1.bf16.msra.mxu0 0
  %648 = vmatprep.subr.bf16.mxu0 0
  %649 = vmatpush1.bf16.msra.mxu0 0
  %650 = vmatprep.subr.bf16.mxu0 0
  %651 = vmatpush1.bf16.msra.mxu0 0
  %652 = vmatprep.subr.bf16.mxu0 0
  %653 = vmatpush1.bf16.msra.mxu0 0
  %654 = vmatprep.subr.bf16.mxu0 0
  %655 = vmatpush1.bf16.msra.mxu0 0
  %656 = vmatprep.subr.bf16.mxu0 0
  %657 = vmatpush1.bf16.msra.mxu0 0
  %658 = vmatprep.subr.bf16.mxu0 0
  %659 = vmatpush1.bf16.msra.mxu0 0
  %660 = vmatprep.subr.bf16.mxu0 0
  %661 = vmatpush1.bf16.msra.mxu0 0
  %662 = vmatprep.subr.bf16.mxu0 0
  %663 = vmatpush1.bf16.msra.mxu0 0
  %664 = vmatprep.subr.bf16.mxu0 0
  %665 = vmatpush1.bf16.msra.mxu0 0
  %666 = vmatprep.mubr.bf16.mxu0 0
  %667 = vmatmul.mubr.bf16.gmra.mrb[0].mxu0 %v629
  %v668 = vpop.f32.mrb[0].mxu0
  %v669 = vadd.f32 0.0, %v668
  %v670 = vpop.f32.mrb[0].mxu0
  %v671 = vpop.f32.mrb[0].mxu0
  %v672 = vpop.f32.mrb[0].mxu0
  %673 = vdwg.mxu0
  %674 = vrot.lane.b32.xlu0 %v434, 112
  %v675 = vpop.permute.xlu0 %674
  %v677 = vsel %vm24, %v625, 0
  %v680 = vsel %vm148, %v675, 0
  %682 = vmatprep.subr.bf16.mxu0 0
  %683 = vmatpush1.bf16.msra.mxu0 %v680
  %684 = vmatprep.subr.bf16.mxu0 0
  %685 = vmatpush1.bf16.msra.mxu0 0
  %686 = vmatprep.subr.bf16.mxu0 0
  %687 = vmatpush1.bf16.msra.mxu0 0
  %688 = vmatprep.subr.bf16.mxu0 0
  %689 = vmatpush1.bf16.msra.mxu0 0
  %690 = vmatprep.subr.bf16.mxu0 0
  %691 = vmatpush1.bf16.msra.mxu0 0
  %692 = vmatprep.subr.bf16.mxu0 0
  %693 = vmatpush1.bf16.msra.mxu0 0
  %694 = vmatprep.subr.bf16.mxu0 0
  %695 = vmatpush1.bf16.msra.mxu0 0
  %696 = vmatprep.subr.bf16.mxu0 0
  %697 = vmatpush1.bf16.msra.mxu0 0
  %698 = vmatprep.subr.bf16.mxu0 0
  %699 = vmatpush1.bf16.msra.mxu0 0
  %700 = vmatprep.subr.bf16.mxu0 0
  %701 = vmatpush1.bf16.msra.mxu0 0
  %702 = vmatprep.subr.bf16.mxu0 0
  %703 = vmatpush1.bf16.msra.mxu0 0
  %704 = vmatprep.subr.bf16.mxu0 0
  %705 = vmatpush1.bf16.msra.mxu0 0
  %706 = vmatprep.subr.bf16.mxu0 0
  %707 = vmatpush1.bf16.msra.mxu0 0
  %708 = vmatprep.subr.bf16.mxu0 0
  %709 = vmatpush1.bf16.msra.mxu0 0
  %710 = vmatprep.subr.bf16.mxu0 0
  %711 = vmatpush1.bf16.msra.mxu0 0
  %712 = vmatprep.subr.bf16.mxu0 0
  %713 = vmatpush1.bf16.msra.mxu0 0
  %714 = vmatprep.mubr.bf16.mxu0 0
  %715 = vmatmul.mubr.bf16.gmra.mrb[0].mxu0 %v677
  %v716 = vpop.f32.mrb[0].mxu0
  %v717 = vadd.f32 0.0, %v716
  %v718 = vpop.f32.mrb[0].mxu0
  %v719 = vpop.f32.mrb[0].mxu0
  %v720 = vpop.f32.mrb[0].mxu0
  %721 = vdwg.mxu0
  %v722 = vpack.c.bf16 %v669, %v669
  %v723 = vpack.c.bf16 %v717, %v717
  %v726 = vunpack.c.l.b16 %v722
  %v727 = vunpack.c.l.b16 %v723
  %v728 = vpack.c.b16 %v726, %v726
  %v729 = vpack.c.b16 %v727, %v727
  %730 = vrot.lane.b32.xlu0 %v728, 16
  %v731 = vpop.permute.xlu0 %730
  %732 = vrot.lane.b32.xlu0 %v729, 16
  %v733 = vpop.permute.xlu0 %732
  %vm736 = vcmask 191616
  %737 = vst.msk [vmem:[%s3] sm:$0xf] %vm736, %v731
  %738 = vst.msk [vmem:[%s3 + $0x4] sm:$0xf] %vm736, %v733
  %739 = vrot.lane.b32.xlu0 %v245, 104
  %v740 = vpop.permute.xlu0 %739
  %741 = vrot.lane.b32.xlu0 %v250, 104
  %v742 = vpop.permute.xlu0 %741
  %v744 = vsel %vm24, %v740, 0
  %v747 = vsel %vm24, %v742, 0
  %749 = vmatprep.subr.bf16.mxu0 0
  %750 = vmatpush1.bf16.xpose.msra.mxu0 %v747
  %751 = vmatprep.subr.bf16.mxu0 0
  %752 = vmatpush1.bf16.xpose.msra.mxu0 0
  %753 = vmatprep.subr.bf16.mxu0 0
  %754 = vmatpush1.bf16.xpose.msra.mxu0 0
  %755 = vmatprep.subr.bf16.mxu0 0
  %756 = vmatpush1.bf16.xpose.msra.mxu0 0
  %757 = vmatprep.subr.bf16.mxu0 0
  %758 = vmatpush1.bf16.xpose.msra.mxu0 0
  %759 = vmatprep.subr.bf16.mxu0 0
  %760 = vmatpush1.bf16.xpose.msra.mxu0 0
  %761 = vmatprep.subr.bf16.mxu0 0
  %762 = vmatpush1.bf16.xpose.msra.mxu0 0
  %763 = vmatprep.subr.bf16.mxu0 0
  %764 = vmatpush1.bf16.xpose.msra.mxu0 0
  %765 = vmatprep.subr.bf16.mxu0 0
  %766 = vmatpush1.bf16.xpose.msra.mxu0 0
  %767 = vmatprep.subr.bf16.mxu0 0
  %768 = vmatpush1.bf16.xpose.msra.mxu0 0
  %769 = vmatprep.subr.bf16.mxu0 0
  %770 = vmatpush1.bf16.xpose.msra.mxu0 0
  %771 = vmatprep.subr.bf16.mxu0 0
  %772 = vmatpush1.bf16.xpose.msra.mxu0 0
  %773 = vmatprep.subr.bf16.mxu0 0
  %774 = vmatpush1.bf16.xpose.msra.mxu0 0
  %775 = vmatprep.subr.bf16.mxu0 0
  %776 = vmatpush1.bf16.xpose.msra.mxu0 0
  %777 = vmatprep.subr.bf16.mxu0 0
  %778 = vmatpush1.bf16.xpose.msra.mxu0 0
  %779 = vmatprep.subr.bf16.mxu0 0
  %780 = vmatpush1.bf16.xpose.msra.mxu0 0
  %781 = vmatprep.mubr.bf16.mxu0 0
  %782 = vmatmul.mubr.bf16.gmra.mrb[0].mxu0 %v744
  %v783 = vpop.f32.mrb[0].mxu0
  %v784 = vadd.f32 0.0, %v783
  %v785 = vpop.f32.mrb[0].mxu0
  %v786 = vpop.f32.mrb[0].mxu0
  %v787 = vpop.f32.mrb[0].mxu0
  %788 = vdwg.mxu0
  %789 = vrot.lane.b32.xlu0 %v301, 104
  %v790 = vpop.permute.xlu0 %789
  %791 = vrot.lane.b32.xlu0 %v306, 104
  %v792 = vpop.permute.xlu0 %791
  %v794 = vsel %vm24, %v790, 0
  %v797 = vsel %vm24, %v792, 0
  %799 = vmatprep.subr.bf16.mxu0 0
  %800 = vmatpush1.bf16.xpose.msra.mxu0 %v797
  %801 = vmatprep.subr.bf16.mxu0 0
  %802 = vmatpush1.bf16.xpose.msra.mxu0 0
  %803 = vmatprep.subr.bf16.mxu0 0
  %804 = vmatpush1.bf16.xpose.msra.mxu0 0
  %805 = vmatprep.subr.bf16.mxu0 0
  %806 = vmatpush1.bf16.xpose.msra.mxu0 0
  %807 = vmatprep.subr.bf16.mxu0 0
  %808 = vmatpush1.bf16.xpose.msra.mxu0 0
  %809 = vmatprep.subr.bf16.mxu0 0
  %810 = vmatpush1.bf16.xpose.msra.mxu0 0
  %811 = vmatprep.subr.bf16.mxu0 0
  %812 = vmatpush1.bf16.xpose.msra.mxu0 0
  %813 = vmatprep.subr.bf16.mxu0 0
  %814 = vmatpush1.bf16.xpose.msra.mxu0 0
  %815 = vmatprep.subr.bf16.mxu0 0
  %816 = vmatpush1.bf16.xpose.msra.mxu0 0
  %817 = vmatprep.subr.bf16.mxu0 0
  %818 = vmatpush1.bf16.xpose.msra.mxu0 0
  %819 = vmatprep.subr.bf16.mxu0 0
  %820 = vmatpush1.bf16.xpose.msra.mxu0 0
  %821 = vmatprep.subr.bf16.mxu0 0
  %822 = vmatpush1.bf16.xpose.msra.mxu0 0
  %823 = vmatprep.subr.bf16.mxu0 0
  %824 = vmatpush1.bf16.xpose.msra.mxu0 0
  %825 = vmatprep.subr.bf16.mxu0 0
  %826 = vmatpush1.bf16.xpose.msra.mxu0 0
  %827 = vmatprep.subr.bf16.mxu0 0
  %828 = vmatpush1.bf16.xpose.msra.mxu0 0
  %829 = vmatprep.subr.bf16.mxu0 0
  %830 = vmatpush1.bf16.xpose.msra.mxu0 0
  %831 = vmatprep.mubr.bf16.mxu0 0
  %832 = vmatmul.mubr.bf16.gmra.mrb[0].mxu0 %v794
  %v833 = vpop.f32.mrb[0].mxu0
  %v834 = vadd.f32 0.0, %v833
  %v835 = vpop.f32.mrb[0].mxu0
  %v836 = vpop.f32.mrb[0].mxu0
  %v837 = vpop.f32.mrb[0].mxu0
  %838 = vdwg.mxu0
  %v839 = vsel %vm118, %v784, -1e+30
  %v840 = vsel %vm118, %v834, -1e+30
  %v841 = vsel %vm24, %v839, -inf
  %842 = vmax.xlane.f32.xlu0 %v841
  %v843 = vpop.xlane.xlu0 %842
  %v844 = vsel %vm24, %v840, -inf
  %845 = vmax.xlane.f32.xlu0 %v844
  %v846 = vpop.xlane.xlu0 %845
  %v847 = vsub.f32 %v839, %v843
  %v848 = vsub.f32 %v840, %v846
  %v849 = vmul.f32 %v847, 1.442695
  %v850 = vpow.pop %v849
  %v851 = vmul.f32 %v848, 1.442695
  %v852 = vpow.pop %v851
  %v853 = vsel %vm24, %v850, 0.0
  %854 = vadd.xlane.f32.xlu0 %v853
  %v855 = vpop.xlane.xlu0 %854
  %v856 = vsel %vm24, %v852, 0.0
  %857 = vadd.xlane.f32.xlu0 %v856
  %v858 = vpop.xlane.xlu0 %857
  %v859 = vrcp.pop %v855
  %v860 = vmul.f32 %v850, %v859
  %v861 = vrcp.pop %v858
  %v862 = vmul.f32 %v852, %v861
  %v863 = vpack.c.bf16 %v860, %v860
  %v864 = vpack.c.bf16 %v862, %v862
  %865 = vrot.lane.b32.xlu0 %v383, 104
  %v866 = vpop.permute.xlu0 %865
  %v868 = vsel %vm24, %v863, 0
  %v871 = vsel %vm148, %v866, 0
  %873 = vmatprep.subr.bf16.mxu0 0
  %874 = vmatpush1.bf16.msra.mxu0 %v871
  %875 = vmatprep.subr.bf16.mxu0 0
  %876 = vmatpush1.bf16.msra.mxu0 0
  %877 = vmatprep.subr.bf16.mxu0 0
  %878 = vmatpush1.bf16.msra.mxu0 0
  %879 = vmatprep.subr.bf16.mxu0 0
  %880 = vmatpush1.bf16.msra.mxu0 0
  %881 = vmatprep.subr.bf16.mxu0 0
  %882 = vmatpush1.bf16.msra.mxu0 0
  %883 = vmatprep.subr.bf16.mxu0 0
  %884 = vmatpush1.bf16.msra.mxu0 0
  %885 = vmatprep.subr.bf16.mxu0 0
  %886 = vmatpush1.bf16.msra.mxu0 0
  %887 = vmatprep.subr.bf16.mxu0 0
  %888 = vmatpush1.bf16.msra.mxu0 0
  %889 = vmatprep.subr.bf16.mxu0 0
  %890 = vmatpush1.bf16.msra.mxu0 0
  %891 = vmatprep.subr.bf16.mxu0 0
  %892 = vmatpush1.bf16.msra.mxu0 0
  %893 = vmatprep.subr.bf16.mxu0 0
  %894 = vmatpush1.bf16.msra.mxu0 0
  %895 = vmatprep.subr.bf16.mxu0 0
  %896 = vmatpush1.bf16.msra.mxu0 0
  %897 = vmatprep.subr.bf16.mxu0 0
  %898 = vmatpush1.bf16.msra.mxu0 0
  %899 = vmatprep.subr.bf16.mxu0 0
  %900 = vmatpush1.bf16.msra.mxu0 0
  %901 = vmatprep.subr.bf16.mxu0 0
  %902 = vmatpush1.bf16.msra.mxu0 0
  %903 = vmatprep.subr.bf16.mxu0 0
  %904 = vmatpush1.bf16.msra.mxu0 0
  %905 = vmatprep.mubr.bf16.mxu0 0
  %906 = vmatmul.mubr.bf16.gmra.mrb[0].mxu0 %v868
  %v907 = vpop.f32.mrb[0].mxu0
  %v908 = vadd.f32 0.0, %v907
  %v909 = vpop.f32.mrb[0].mxu0
  %v910 = vpop.f32.mrb[0].mxu0
  %v911 = vpop.f32.mrb[0].mxu0
  %912 = vdwg.mxu0
  %913 = vrot.lane.b32.xlu0 %v434, 104
  %v914 = vpop.permute.xlu0 %913
  %v916 = vsel %vm24, %v864, 0
  %v919 = vsel %vm148, %v914, 0
  %921 = vmatprep.subr.bf16.mxu0 0
  %922 = vmatpush1.bf16.msra.mxu0 %v919
  %923 = vmatprep.subr.bf16.mxu0 0
  %924 = vmatpush1.bf16.msra.mxu0 0
  %925 = vmatprep.subr.bf16.mxu0 0
  %926 = vmatpush1.bf16.msra.mxu0 0
  %927 = vmatprep.subr.bf16.mxu0 0
  %928 = vmatpush1.bf16.msra.mxu0 0
  %929 = vmatprep.subr.bf16.mxu0 0
  %930 = vmatpush1.bf16.msra.mxu0 0
  %931 = vmatprep.subr.bf16.mxu0 0
  %932 = vmatpush1.bf16.msra.mxu0 0
  %933 = vmatprep.subr.bf16.mxu0 0
  %934 = vmatpush1.bf16.msra.mxu0 0
  %935 = vmatprep.subr.bf16.mxu0 0
  %936 = vmatpush1.bf16.msra.mxu0 0
  %937 = vmatprep.subr.bf16.mxu0 0
  %938 = vmatpush1.bf16.msra.mxu0 0
  %939 = vmatprep.subr.bf16.mxu0 0
  %940 = vmatpush1.bf16.msra.mxu0 0
  %941 = vmatprep.subr.bf16.mxu0 0
  %942 = vmatpush1.bf16.msra.mxu0 0
  %943 = vmatprep.subr.bf16.mxu0 0
  %944 = vmatpush1.bf16.msra.mxu0 0
  %945 = vmatprep.subr.bf16.mxu0 0
  %946 = vmatpush1.bf16.msra.mxu0 0
  %947 = vmatprep.subr.bf16.mxu0 0
  %948 = vmatpush1.bf16.msra.mxu0 0
  %949 = vmatprep.subr.bf16.mxu0 0
  %950 = vmatpush1.bf16.msra.mxu0 0
  %951 = vmatprep.subr.bf16.mxu0 0
  %952 = vmatpush1.bf16.msra.mxu0 0
  %953 = vmatprep.mubr.bf16.mxu0 0
  %954 = vmatmul.mubr.bf16.gmra.mrb[0].mxu0 %v916
  %v955 = vpop.f32.mrb[0].mxu0
  %v956 = vadd.f32 0.0, %v955
  %v957 = vpop.f32.mrb[0].mxu0
  %v958 = vpop.f32.mrb[0].mxu0
  %v959 = vpop.f32.mrb[0].mxu0
  %960 = vdwg.mxu0
  %v961 = vpack.c.bf16 %v908, %v908
  %v962 = vpack.c.bf16 %v956, %v956
  %v965 = vunpack.c.l.b16 %v961
  %v966 = vunpack.c.l.b16 %v962
  %v967 = vpack.c.b16 %v965, %v965
  %v968 = vpack.c.b16 %v966, %v966
  %969 = vrot.lane.b32.xlu0 %v967, 24
  %v970 = vpop.permute.xlu0 %969
  %971 = vrot.lane.b32.xlu0 %v968, 24
  %v972 = vpop.permute.xlu0 %971
  %vm975 = vcmask 257216
  %976 = vst.msk [vmem:[%s3] sm:$0xf] %vm975, %v970
  %977 = vst.msk [vmem:[%s3 + $0x4] sm:$0xf] %vm975, %v972
  // Predicated region
  $region14: #{encode_image.16} parent=0 // pred_check
    _
  $region15: #{encode_image.16} parent=0 // pred_check_branch
    %979 = sbr.rel (0) target = $region17
  $region16: #{encode_image.16} parent=0 // pred_region
    _
  $region17: #{encode_image.16} parent=0 // pred_fallthru
    _
  // Predicated region
  $region18: #{encode_image.16} parent=0 // pred_check
    _
  $region19: #{encode_image.16} parent=0 // pred_check_branch
    %981 = sbr.rel (0) target = $region21
  $region20: #{encode_image.16} parent=0 // pred_region
    _
  $region21: #{encode_image.16} parent=0 // pred_fallthru
    _

// kernel: encode_image.18
$region0: #{encode_image.18}
  #allocation0 [shape = 'u32[]', space=smem, size = 0x4, offset = 0x4, fixed_abs, tag = 'smem constant byte address 0x4 - core index']
  #allocation1 [shape = 'u32[144,128]{1,0:T(1,128)}', space=vmem, size = 0x12000, scoped, tag = 'internal scratch']
  %s0 = inlined_call_operand.vmem [shape: f32[16,32], index: 0, kind: input, shape index: {}]
  %s1 = inlined_call_operand.vmem [shape: bf16[32,128], index: 1, kind: input, shape index: {}]
  %s2 = inlined_call_operand.vmem [shape: f32[1,128], index: 2, kind: input, shape index: {}]
  %s3 = inlined_call_operand.vmem [shape: f32[1,32], index: 3, kind: input, shape index: {}]
  %s4 = inlined_call_operand.vmem [shape: f32[1,32], index: 4, kind: input, shape index: {}]
  %s5 = inlined_call_operand.vmem [shape: bf16[16,128], index: 5, kind: output, shape index: {}]
  %s6 = sld [smem:[#allocation0]]
  $region30: #{encode_image.18} parent=0
    _
  %s8 = ssub.s32 1, %s6
  %s9 = scalar_select 0, %s8, %s6
  // Predicated region
  $region2: #{encode_image.18} parent=0 // pred_check
    _
  $region3: #{encode_image.18} parent=0 // pred_check_branch
    %11 = sbr.rel (0) target = $region5
  $region4: #{encode_image.18} parent=0 // pred_region
    _
  $region5: #{encode_image.18} parent=0 // pred_fallthru
    _
  // Predicated region
  $region6: #{encode_image.18} parent=0 // pred_check
    _
  $region7: #{encode_image.18} parent=0 // pred_check_branch
    %13 = sbr.rel (0) target = $region9
  $region8: #{encode_image.18} parent=0 // pred_region
    _
  $region9: #{encode_image.18} parent=0 // pred_fallthru
    _
  // Predicated region
  $region10: #{encode_image.18} parent=0 // pred_check
    _
  $region11: #{encode_image.18} parent=0 // pred_check_branch
    %15 = sbr.rel (0) target = $region13
  $region12: #{encode_image.18} parent=0 // pred_region
    _
  $region13: #{encode_image.18} parent=0 // pred_fallthru
    _
  // Predicated region
  $region14: #{encode_image.18} parent=0 // pred_check
    _
  $region15: #{encode_image.18} parent=0 // pred_check_branch
    %17 = sbr.rel (0) target = $region17
  $region16: #{encode_image.18} parent=0 // pred_region
    _
  $region17: #{encode_image.18} parent=0 // pred_fallthru
    _
  // Predicated region
  $region18: #{encode_image.18} parent=0 // pred_check
    _
  $region19: #{encode_image.18} parent=0 // pred_check_branch
    %19 = sbr.rel (0) target = $region21
  $region20: #{encode_image.18} parent=0 // pred_region
    _
  $region21: #{encode_image.18} parent=0 // pred_fallthru
    _
  %v21 = vld [vmem:[%s0] sm:$0xff]
  %v22 = vld [vmem:[%s0 + $0x8] sm:$0xff]
  %vm23 = vcmask 261120
  %v24 = vsel %vm23, %v21, 0.0
  %25 = vadd.xlane.f32.xlu0 %v24
  %v26 = vpop.xlane.xlu0 %25
  %v27 = vsel %vm23, %v22, 0.0
  %28 = vadd.xlane.f32.xlu0 %v27
  %v29 = vpop.xlane.xlu0 %28
  %v30 = vrcp.pop 32.0
  %v31 = vmul.f32 %v26, %v30
  %v32 = vmul.f32 %v29, %v30
  %v33 = vsub.f32 %v21, %v31
  %v34 = vsub.f32 %v22, %v32
  %v35 = vmul.f32 %v33, %v33
  %v36 = vmul.f32 %v34, %v34
  %v37 = vsel %vm23, %v35, 0.0
  %38 = vadd.xlane.f32.xlu0 %v37
  %v39 = vpop.xlane.xlu0 %38
  %v40 = vsel %vm23, %v36, 0.0
  %41 = vadd.xlane.f32.xlu0 %v40
  %v42 = vpop.xlane.xlu0 %41
  %v43 = vmul.f32 %v39, %v30
  %v44 = vmul.f32 %v42, %v30
  %v45 = vadd.f32 %v43, 1e-05
  %v46 = vadd.f32 %v44, 1e-05
  %v47 = vrsqrt.pop %v45
  %v48 = vrsqrt.pop %v46
  %v49 = vmul.f32 %v33, %v47
  %v50 = vmul.f32 %v34, %v48
  %v51 = vld [vmem:[%s3] sm:$0x1]
  %v53 = vlaneseq
  %v54 = vshrl.u32 %v53, 7
  %v55 = vsub.s32 0, %v54
  %v56 = vrot.slane %v51, %v55
  %v58 = vmul.f32 %v49, %v56
  %v59 = vmul.f32 %v50, %v56
  %v60 = vld [vmem:[%s4] sm:$0x1]
  %v62 = vlaneseq
  %v63 = vshrl.u32 %v62, 7
  %v64 = vsub.s32 0, %v63
  %v65 = vrot.slane %v60, %v64
  %v67 = vadd.f32 %v58, %v65
  %v68 = vadd.f32 %v59, %v65
  %v69 = vpack.c.bf16 %v68, %v67
  %v70 = vld [vmem:[%s1] sm:$0xf]
  %v71 = vld [vmem:[%s1 + $0x4] sm:$0xf]
  %v72 = vld [vmem:[%s1 + $0x8] sm:$0xf]
  %v73 = vld [vmem:[%s1 + $0xc] sm:$0xf]
  %v74 = vld [vmem:[%s2] sm:$0x1]
  %v76 = vlaneseq
  %v77 = vshrl.u32 %v76, 7
  %v78 = vsub.s32 0, %v77
  %v79 = vrot.slane %v74, %v78
  %v85 = vunpack.c.l.b16 %v70
  %v86 = vunpack.c.l.b16 %v71
  %v87 = vunpack.c.l.b16 %v72
  %v88 = vunpack.c.l.b16 %v73
  %v89 = vpack.c.b16 %v86, %v85
  %v90 = vpack.c.b16 %v88, %v87
  %v94 = vsel %vm23, %v69, 0
  %96 = vmatprep.subr.bf16.mxu0 0
  %97 = vmatpush1.bf16.msra.mxu0 %v89
  %98 = vmatprep.subr.bf16.mxu0 0
  %99 = vmatpush1.bf16.msra.mxu0 %v90
  %100 = vmatprep.subr.bf16.mxu0 0
  %101 = vmatpush1.bf16.msra.mxu0 0
  %102 = vmatprep.subr.bf16.mxu0 0
  %103 = vmatpush1.bf16.msra.mxu0 0
  %104 = vmatprep.subr.bf16.mxu0 0
  %105 = vmatpush1.bf16.msra.mxu0 0
  %106 = vmatprep.subr.bf16.mxu0 0
  %107 = vmatpush1.bf16.msra.mxu0 0
  %108 = vmatprep.subr.bf16.mxu0 0
  %109 = vmatpush1.bf16.msra.mxu0 0
  %110 = vmatprep.subr.bf16.mxu0 0
  %111 = vmatpush1.bf16.msra.mxu0 0
  %112 = vmatprep.subr.bf16.mxu0 0
  %113 = vmatpush1.bf16.msra.mxu0 0
  %114 = vmatprep.subr.bf16.mxu0 0
  %115 = vmatpush1.bf16.msra.mxu0 0
  %116 = vmatprep.subr.bf16.mxu0 0
  %117 = vmatpush1.bf16.msra.mxu0 0
  %118 = vmatprep.subr.bf16.mxu0 0
  %119 = vmatpush1.bf16.msra.mxu0 0
  %120 = vmatprep.subr.bf16.mxu0 0
  %121 = vmatpush1.bf16.msra.mxu0 0
  %122 = vmatprep.subr.bf16.mxu0 0
  %123 = vmatpush1.bf16.msra.mxu0 0
  %124 = vmatprep.subr.bf16.mxu0 0
  %125 = vmatpush1.bf16.msra.mxu0 0
  %126 = vmatprep.subr.bf16.mxu0 0
  %127 = vmatpush1.bf16.msra.mxu0 0
  %128 = vmatprep.mubr.bf16.mxu0 0
  %129 = vmatmul.mubr.bf16.gmra.mrb[0].mxu0 %v94
  %v130 = vpop.f32.mrb[0].mxu0
  %v131 = vadd.f32 %v79, %v130
  %v132 = vpop.f32.mrb[0].mxu0
  %v133 = vpop.f32.mrb[0].mxu0
  %v134 = vadd.f32 %v79, %v133
  %v135 = vpop.f32.mrb[0].mxu0
  %136 = vdwg.mxu0
  %v137 = vmul.f32 %v131, 1.702
  %v138 = vmul.f32 %v134, 1.702
  %v139 = vxor.u32 %v137, 2147483648
  %v140 = vxor.u32 %v138, 2147483648
  %v141 = vmul.f32 %v139, 1.442695
  %v142 = vpow.pop %v141
  %v143 = vmul.f32 %v140, 1.442695
  %v144 = vpow.pop %v143
  %v145 = vadd.f32 %v142, 1.0
  %v146 = vadd.f32 %v144, 1.0
  %v147 = vrcp.pop %v145
  %v148 = vmul.f32 1.0, %v147
  %v149 = vrcp.pop %v146
  %v150 = vmul.f32 1.0, %v149
  %v151 = vmul.f32 %v131, %v148
  %v152 = vmul.f32 %v134, %v150
  %v153 = vpack.c.bf16 %v152, %v151
  %v155 = vunpack.c.l.b16 %v153
  %v156 = vunpack.c.h.b16 %v153
  %v157 = vpack.c.b16 %v155, %v155
  %v158 = vpack.c.b16 %v156, %v156
  %161 = vst [vmem:[%s5] sm:$0xf] %v157
  %162 = vst [vmem:[%s5 + $0x4] sm:$0xf] %v158
  // Predicated region
  $region22: #{encode_image.18} parent=0 // pred_check
    _
  $region23: #{encode_image.18} parent=0 // pred_check_branch
    %164 = sbr.rel (0) target = $region25
  $region24: #{encode_image.18} parent=0 // pred_region
    _
  $region25: #{encode_image.18} parent=0 // pred_fallthru
    _
  // Predicated region
  $region26: #{encode_image.18} parent=0 // pred_check
    _
  $region27: #{encode_image.18} parent=0 // pred_check_branch
    %166 = sbr.rel (0) target = $region29
  $region28: #{encode_image.18} parent=0 // pred_region
    _
  $region29: #{encode_image.18} parent=0 // pred_fallthru
    _

// kernel: encode_image.19
$region0: #{encode_image.19}
  #allocation0 [shape = 'u32[]', space=smem, size = 0x4, offset = 0x4, fixed_abs, tag = 'smem constant byte address 0x4 - core index']
  #allocation1 [shape = 'u32[144,128]{1,0:T(1,128)}', space=vmem, size = 0x12000, scoped, tag = 'internal scratch']
  %s0 = inlined_call_operand.vmem [shape: bf16[16,128], index: 0, kind: input, shape index: {}]
  %s1 = inlined_call_operand.vmem [shape: bf16[128,32], index: 1, kind: input, shape index: {}]
  %s2 = inlined_call_operand.vmem [shape: f32[1,32], index: 2, kind: input, shape index: {}]
  %s3 = inlined_call_operand.vmem [shape: f32[16,32], index: 3, kind: input, shape index: {}]
  %s4 = inlined_call_operand.vmem [shape: f32[16,32], index: 4, kind: output, shape index: {}]
  %s5 = sld [smem:[#allocation0]]
  $region26: #{encode_image.19} parent=0
    _
  %s7 = ssub.s32 1, %s5
  %s8 = scalar_select 0, %s7, %s5
  // Predicated region
  $region2: #{encode_image.19} parent=0 // pred_check
    _
  $region3: #{encode_image.19} parent=0 // pred_check_branch
    %10 = sbr.rel (0) target = $region5
  $region4: #{encode_image.19} parent=0 // pred_region
    _
  $region5: #{encode_image.19} parent=0 // pred_fallthru
    _
  // Predicated region
  $region6: #{encode_image.19} parent=0 // pred_check
    _
  $region7: #{encode_image.19} parent=0 // pred_check_branch
    %12 = sbr.rel (0) target = $region9
  $region8: #{encode_image.19} parent=0 // pred_region
    _
  $region9: #{encode_image.19} parent=0 // pred_fallthru
    _
  // Predicated region
  $region10: #{encode_image.19} parent=0 // pred_check
    _
  $region11: #{encode_image.19} parent=0 // pred_check_branch
    %14 = sbr.rel (0) target = $region13
  $region12: #{encode_image.19} parent=0 // pred_region
    _
  $region13: #{encode_image.19} parent=0 // pred_fallthru
    _
  // Predicated region
  $region14: #{encode_image.19} parent=0 // pred_check
    _
  $region15: #{encode_image.19} parent=0 // pred_check_branch
    %16 = sbr.rel (0) target = $region17
  $region16: #{encode_image.19} parent=0 // pred_region
    _
  $region17: #{encode_image.19} parent=0 // pred_fallthru
    _
  %v18 = vld [vmem:[%s0] sm:$0xf]
  %v19 = vld [vmem:[%s0 + $0x4] sm:$0xf]
  %v20 = vld [vmem:[%s1] sm:$0xf]
  %v21 = vld [vmem:[%s1 + $0x4] sm:$0xf]
  %v22 = vld [vmem:[%s1 + $0x8] sm:$0xf]
  %v23 = vld [vmem:[%s1 + $0xc] sm:$0xf]
  %v24 = vld [vmem:[%s1 + $0x10] sm:$0xf]
  %v25 = vld [vmem:[%s1 + $0x14] sm:$0xf]
  %v26 = vld [vmem:[%s1 + $0x18] sm:$0xf]
  %v27 = vld [vmem:[%s1 + $0x1c] sm:$0xf]
  %v28 = vld [vmem:[%s1 + $0x20] sm:$0xf]
  %v29 = vld [vmem:[%s1 + $0x24] sm:$0xf]
  %v30 = vld [vmem:[%s1 + $0x28] sm:$0xf]
  %v31 = vld [vmem:[%s1 + $0x2c] sm:$0xf]
  %v32 = vld [vmem:[%s1 + $0x30] sm:$0xf]
  %v33 = vld [vmem:[%s1 + $0x34] sm:$0xf]
  %v34 = vld [vmem:[%s1 + $0x38] sm:$0xf]
  %v35 = vld [vmem:[%s1 + $0x3c] sm:$0xf]
  %v36 = vld [vmem:[%s2] sm:$0x1]
  %v38 = vlaneseq
  %v39 = vshrl.u32 %v38, 7
  %v40 = vsub.s32 0, %v39
  %v41 = vrot.slane %v36, %v40
  %v45 = vunpack.c.l.b16 %v18
  %v46 = vunpack.c.l.b16 %v19
  %v47 = vpack.c.b16 %v46, %v45
  %v65 = vunpack.c.l.b16 %v20
  %v66 = vunpack.c.l.b16 %v21
  %v67 = vunpack.c.l.b16 %v22
  %v68 = vunpack.c.l.b16 %v23
  %v69 = vunpack.c.l.b16 %v24
  %v70 = vunpack.c.l.b16 %v25
  %v71 = vunpack.c.l.b16 %v26
  %v72 = vunpack.c.l.b16 %v27
  %v73 = vunpack.c.l.b16 %v28
  %v74 = vunpack.c.l.b16 %v29
  %v75 = vunpack.c.l.b16 %v30
  %v76 = vunpack.c.l.b16 %v31
  %v77 = vunpack.c.l.b16 %v32
  %v78 = vunpack.c.l.b16 %v33
  %v79 = vunpack.c.l.b16 %v34
  %v80 = vunpack.c.l.b16 %v35
  %v81 = vpack.c.b16 %v66, %v65
  %v82 = vpack.c.b16 %v68, %v67
  %v83 = vpack.c.b16 %v70, %v69
  %v84 = vpack.c.b16 %v72, %v71
  %v85 = vpack.c.b16 %v74, %v73
  %v86 = vpack.c.b16 %v76, %v75
  %v87 = vpack.c.b16 %v78, %v77
  %v88 = vpack.c.b16 %v80, %v79
  %97 = vmatprep.subr.bf16.mxu0 0
  %98 = vmatpush1.bf16.msra.mxu0 %v81
  %99 = vmatprep.subr.bf16.mxu0 0
  %100 = vmatpush1.bf16.msra.mxu0 %v82
  %101 = vmatprep.subr.bf16.mxu0 0
  %102 = vmatpush1.bf16.msra.mxu0 %v83
  %103 = vmatprep.subr.bf16.mxu0 0
  %104 = vmatpush1.bf16.msra.mxu0 %v84
  %105 = vmatprep.subr.bf16.mxu0 0
  %106 = vmatpush1.bf16.msra.mxu0 %v85
  %107 = vmatprep.subr.bf16.mxu0 0
  %108 = vmatpush1.bf16.msra.mxu0 %v86
  %109 = vmatprep.subr.bf16.mxu0 0
  %110 = vmatpush1.bf16.msra.mxu0 %v87
  %111 = vmatprep.subr.bf16.mxu0 0
  %112 = vmatpush1.bf16.msra.mxu0 %v88
  %113 = vmatprep.subr.bf16.mxu0 0
  %114 = vmatpush1.bf16.msra.mxu0 0
  %115 = vmatprep.subr.bf16.mxu0 0
  %116 = vmatpush1.bf16.msra.mxu0 0
  %117 = vmatprep.subr.bf16.mxu0 0
  %118 = vmatpush1.bf16.msra.mxu0 0
  %119 = vmatprep.subr.bf16.mxu0 0
  %120 = vmatpush1.bf16.msra.mxu0 0
  %121 = vmatprep.subr.bf16.mxu0 0
  %122 = vmatpush1.bf16.msra.mxu0 0
  %123 = vmatprep.subr.bf16.mxu0 0
  %124 = vmatpush1.bf16.msra.mxu0 0
  %125 = vmatprep.subr.bf16.mxu0 0
  %126 = vmatpush1.bf16.msra.mxu0 0
  %127 = vmatprep.subr.bf16.mxu0 0
  %128 = vmatpush1.bf16.msra.mxu0 0
  %129 = vmatprep.mubr.bf16.mxu0 0
  %130 = vmatmul.mubr.bf16.gmra.mrb[0].mxu0 %v47
  %v131 = vpop.f32.mrb[0].mxu0
  %v132 = vadd.f32 %v41, %v131
  %v133 = vpop.f32.mrb[0].mxu0
  %v134 = vpop.f32.mrb[0].mxu0
  %v135 = vadd.f32 %v41, %v134
  %v136 = vpop.f32.mrb[0].mxu0
  %137 = vdwg.mxu0
  %v138 = vld [vmem:[%s3] sm:$0xff]
  %v139 = vld [vmem:[%s3 + $0x8] sm:$0xff]
  %v140 = vadd.f32 %v132, %v138
  %v141 = vadd.f32 %v135, %v139
  %vm142 = vcmask 261120
  %143 = vst.msk [vmem:[%s4] sm:$0xff] %vm142, %v140
  %144 = vst.msk [vmem:[%s4 + $0x8] sm:$0xff] %vm142, %v141
  // Predicated region
  $region18: #{encode_image.19} parent=0 // pred_check
    _
  $region19: #{encode_image.19} parent=0 // pred_check_branch
    %146 = sbr.rel (0) target = $region21
  $region20: #{encode_image.19} parent=0 // pred_region
    _
  $region21: #{encode_image.19} parent=0 // pred_fallthru
    _
  // Predicated region
  $region22: #{encode_image.19} parent=0 // pred_check
    _
  $region23: #{encode_image.19} parent=0 // pred_check_branch
    %148 = sbr.rel (0) target = $region25
  $region24: #{encode_image.19} parent=0 // pred_region
    _
  $region25: #{encode_image.19} parent=0 // pred_fallthru
    _

// kernel: encode_image.25
$region0: #{encode_image.25}
  #allocation0 [shape = 'u32[]', space=smem, size = 0x4, offset = 0x4, fixed_abs, tag = 'smem constant byte address 0x4 - core index']
  #allocation1 [shape = 'u32[144,128]{1,0:T(1,128)}', space=vmem, size = 0x12000, scoped, tag = 'internal scratch']
  %s0 = inlined_call_operand.vmem [shape: f32[2,32], index: 0, kind: input, shape index: {}]
  %s1 = inlined_call_operand.vmem [shape: bf16[32,16], index: 1, kind: input, shape index: {}]
  %s2 = inlined_call_operand.vmem [shape: f32[1,32], index: 2, kind: input, shape index: {}]
  %s3 = inlined_call_operand.vmem [shape: f32[1,32], index: 3, kind: input, shape index: {}]
  %s4 = inlined_call_operand.hbm [shape: f32[2,16], index: 4, kind: output, shape index: {}]
  %s5 = sld [smem:[#allocation0]]
  $region26: #{encode_image.25} parent=0
    _
  %s7 = ssub.s32 1, %s5
  %s8 = scalar_select 0, %s7, %s5
  $region1: #{encode_image.25} parent=0
    #allocation2 [shape = 'u8[1024]{0}', space=vmem, size = 0x400, scoped, tag = 'output window, operand 0, single buffered']
    #allocation3 [shape = 's32[1]{0}', space=sflag, size = 0x4, scoped, tag = 'scoped memory for encode_image.25']
    %9 = vsyncpa [#allocation3], 0
    // Predicated region
    $region2: #{encode_image.25} parent=1 // pred_check
      _
    $region3: #{encode_image.25} parent=1 // pred_check_branch
      %11 = sbr.rel (0) target = $region5
    $region4: #{encode_image.25} parent=1 // pred_region
      _
    $region5: #{encode_image.25} parent=1 // pred_fallthru
      _
    // Predicated region
    $region6: #{encode_image.25} parent=1 // pred_check
      _
    $region7: #{encode_image.25} parent=1 // pred_check_branch
      %13 = sbr.rel (0) target = $region9
    $region8: #{encode_image.25} parent=1 // pred_region
      _
    $region9: #{encode_image.25} parent=1 // pred_fallthru
      _
    // Predicated region
    $region10: #{encode_image.25} parent=1 // pred_check
      _
    $region11: #{encode_image.25} parent=1 // pred_check_branch
      %15 = sbr.rel (0) target = $region13
    $region12: #{encode_image.25} parent=1 // pred_region
      _
    $region13: #{encode_image.25} parent=1 // pred_fallthru
      _
    // Predicated region
    $region14: #{encode_image.25} parent=1 // pred_check
      _
    $region15: #{encode_image.25} parent=1 // pred_check_branch
      %17 = sbr.rel (0) target = $region17
    $region16: #{encode_image.25} parent=1 // pred_region
      _
    $region17: #{encode_image.25} parent=1 // pred_fallthru
      _
    %v19 = vld [vmem:[%s0] sm:$0x3]
    %vm20 = vcmask 254976
    %v21 = vsel %vm20, %v19, 0.0
    %22 = vadd.xlane.f32.xlu0 %v21
    %v23 = vpop.xlane.xlu0 %22
    %v24 = vrcp.pop 32.0
    %v25 = vmul.f32 %v23, %v24
    %v26 = vsub.f32 %v19, %v25
    %v27 = vmul.f32 %v26, %v26
    %v28 = vsel %vm20, %v27, 0.0
    %29 = vadd.xlane.f32.xlu0 %v28
    %v30 = vpop.xlane.xlu0 %29
    %v31 = vmul.f32 %v30, %v24
    %v32 = vadd.f32 %v31, 1e-05
    %v33 = vrsqrt.pop %v32
    %v34 = vmul.f32 %v26, %v33
    %v35 = vld [vmem:[%s2] sm:$0x1]
    %v37 = vlaneseq
    %v38 = vshrl.u32 %v37, 7
    %v39 = vsub.s32 0, %v38
    %v40 = vrot.slane %v35, %v39
    %v42 = vmul.f32 %v34, %v40
    %v43 = vld [vmem:[%s3] sm:$0x1]
    %v45 = vlaneseq
    %v46 = vshrl.u32 %v45, 7
    %v47 = vsub.s32 0, %v46
    %v48 = vrot.slane %v43, %v47
    %v50 = vadd.f32 %v42, %v48
    %v51 = vpack.c.bf16 %v50, %v50
    %v52 = vld [vmem:[%s1] sm:$0xf]
    %v53 = vld [vmem:[%s1 + $0x4] sm:$0xf]
    %v54 = vld [vmem:[%s1 + $0x8] sm:$0xf]
    %v55 = vld [vmem:[%s1 + $0xc] sm:$0xf]
    %v60 = vunpack.c.l.b16 %v52
    %v61 = vunpack.c.l.b16 %v53
    %v62 = vunpack.c.l.b16 %v54
    %v63 = vunpack.c.l.b16 %v55
    %v64 = vpack.c.b16 %v61, %v60
    %v65 = vpack.c.b16 %v63, %v62
    %vm68 = vcmask 261120
    %v70 = vsel %vm68, %v51, 0
    %72 = vmatprep.subr.bf16.mxu0 0
    %73 = vmatpush1.bf16.msra.mxu0 %v64
    %74 = vmatprep.subr.bf16.mxu0 0
    %75 = vmatpush1.bf16.msra.mxu0 %v65
    %76 = vmatprep.subr.bf16.mxu0 0
    %77 = vmatpush1.bf16.msra.mxu0 0
    %78 = vmatprep.subr.bf16.mxu0 0
    %79 = vmatpush1.bf16.msra.mxu0 0
    %80 = vmatprep.subr.bf16.mxu0 0
    %81 = vmatpush1.bf16.msra.mxu0 0
    %82 = vmatprep.subr.bf16.mxu0 0
    %83 = vmatpush1.bf16.msra.mxu0 0
    %84 = vmatprep.subr.bf16.mxu0 0
    %85 = vmatpush1.bf16.msra.mxu0 0
    %86 = vmatprep.subr.bf16.mxu0 0
    %87 = vmatpush1.bf16.msra.mxu0 0
    %88 = vmatprep.subr.bf16.mxu0 0
    %89 = vmatpush1.bf16.msra.mxu0 0
    %90 = vmatprep.subr.bf16.mxu0 0
    %91 = vmatpush1.bf16.msra.mxu0 0
    %92 = vmatprep.subr.bf16.mxu0 0
    %93 = vmatpush1.bf16.msra.mxu0 0
    %94 = vmatprep.subr.bf16.mxu0 0
    %95 = vmatpush1.bf16.msra.mxu0 0
    %96 = vmatprep.subr.bf16.mxu0 0
    %97 = vmatpush1.bf16.msra.mxu0 0
    %98 = vmatprep.subr.bf16.mxu0 0
    %99 = vmatpush1.bf16.msra.mxu0 0
    %100 = vmatprep.subr.bf16.mxu0 0
    %101 = vmatpush1.bf16.msra.mxu0 0
    %102 = vmatprep.subr.bf16.mxu0 0
    %103 = vmatpush1.bf16.msra.mxu0 0
    %104 = vmatprep.mubr.bf16.mxu0 0
    %105 = vmatmul.mubr.bf16.gmra.mrb[0].mxu0 %v70
    %v106 = vpop.f32.mrb[0].mxu0
    %v107 = vadd.f32 0.0, %v106
    %v108 = vpop.f32.mrb[0].mxu0
    %v109 = vpop.f32.mrb[0].mxu0
    %v110 = vpop.f32.mrb[0].mxu0
    %111 = vdwg.mxu0
    %vm112 = vcmask 123904
    %113 = vst.msk [vmem:[#allocation2] sm:$0x3] %vm112, %v107
    // Predicated region
    $region18: #{encode_image.25} parent=1 // pred_check
      _
    $region19: #{encode_image.25} parent=1 // pred_check_branch
      %115 = sbr.rel (0) target = $region21
    $region20: #{encode_image.25} parent=1 // pred_region
      %s117 = ssub.s32 32, 32
      %118 = vsyncadd [#allocation3], %s117
      %s120 = sshll.u32 [#allocation2], 4
      %s121 = int_to_ptr.vmem [resolvable:$true] %s120
      %123 = dma.vmem_to_hbm [thread:$0]  %s121, 32, %s4, [#allocation3]
    $region21: #{encode_image.25} parent=1 // pred_fallthru
      _
    // Predicated region
    $region22: #{encode_image.25} parent=1 // pred_check
      _
    $region23: #{encode_image.25} parent=1 // pred_check_branch
      %125 = sbr.rel (0) target = $region25
    $region24: #{encode_image.25} parent=1 // pred_region
      %126 = dma.done [#allocation3], 32
    $region25: #{encode_image.25} parent=1 // pred_fallthru
      _
    %127 = vsyncpa [#allocation3], 1

</llo_original>
